<compile_context>
chip_gen: v7x
topology: tpu7x:2x2x1
jax: 0.10.0
libtpu: 0.0.40
codegen_flags: <defaults>
</compile_context>

<pallas_src>
import functools

import jax
import jax.numpy as jnp
import numpy as np
from jax.experimental import pallas as pl
from jax.experimental.pallas import tpu as pltpu

IN_FEATURES = 9
OUT_FEATURES = 5                 # number of tasks
HIDDEN_DIM = 17
GROWTH = 4
DENSE_LAYERS = 2
C1 = IN_FEATURES + GROWTH                            # 13 (after dense layer 1)
DENSE_OUT = IN_FEATURES + DENSE_LAYERS * GROWTH      # 17
FINAL_DIM = HIDDEN_DIM + DENSE_OUT                   # 34
LN_EPS = 1e-5
SLAB_LANES = 128

_HI = jax.lax.Precision.HIGHEST


def _round_up(n, m):
    return (n + m - 1) // m * m


def _cdiv(a, b):
    return (a + b - 1) // b


def _tensorcores_per_chip():
    try:
        kind = jax.devices()[0].device_kind.lower()
    except Exception:
        return 1
    # v4 / v5p (megacore) and v7x-class chips expose 2 TensorCores per device.
    return 2 if any(t in kind for t in ("v4", "v5p", "v7", "7x")) else 1


_NUM_TENSORCORES = _tensorcores_per_chip()


# =============================================================================
# Reference math (original (B, F) layout, matches the PyTorch module exactly)
# =============================================================================
def _layernorm_ref(x, w, b):
    mu = jnp.mean(x, axis=-1, keepdims=True)
    var = jnp.mean((x - mu) ** 2, axis=-1, keepdims=True)
    return (x - mu) * jax.lax.rsqrt(var + LN_EPS) * w + b


def _dense_layer_ref(x, ln_w, ln_b, fc_w, fc_b):
    out = jnp.maximum(_layernorm_ref(x, ln_w, ln_b), 0.0)
    out = jnp.dot(out, fc_w, precision=_HI) + fc_b
    out = jnp.maximum(out, 0.0)
    return jnp.concatenate([x, out], axis=1)        # dropout = identity (eval)


def _residual_block_ref(x, fc1_w, fc1_b, ln1_w, ln1_b, fc2_w, fc2_b, ln2_w, ln2_b):
    out = jnp.dot(x, fc1_w, precision=_HI) + fc1_b
    out = jnp.maximum(out, 0.0)
    out = _layernorm_ref(out, ln1_w, ln1_b)
    out = jnp.dot(out, fc2_w, precision=_HI) + fc2_b
    out = jnp.maximum(out, 0.0)
    out = _layernorm_ref(out, ln2_w, ln2_b)
    return out + x


def _reference_math(x, p):
    (dl1_ln_w, dl1_ln_b, dl1_fc_w, dl1_fc_b,
     dl2_ln_w, dl2_ln_b, dl2_fc_w, dl2_fc_b,
     proj_w, proj_b, lni_w, lni_b,
     r1_fc1_w, r1_fc1_b, r1_ln1_w, r1_ln1_b,
     r1_fc2_w, r1_fc2_b, r1_ln2_w, r1_ln2_b,
     r2_fc1_w, r2_fc1_b, r2_ln1_w, r2_ln1_b,
     r2_fc2_w, r2_fc2_b, r2_ln2_w, r2_ln2_b,
     hz_w, hz_b) = p

    d = _dense_layer_ref(x, dl1_ln_w, dl1_ln_b, dl1_fc_w, dl1_fc_b)
    d = _dense_layer_ref(d, dl2_ln_w, dl2_ln_b, dl2_fc_w, dl2_fc_b)

    s = jnp.dot(d, proj_w, precision=_HI) + proj_b
    s = jnp.maximum(s, 0.0)
    s = _layernorm_ref(s, lni_w, lni_b)
    s = _residual_block_ref(s, r1_fc1_w, r1_fc1_b, r1_ln1_w, r1_ln1_b,
                            r1_fc2_w, r1_fc2_b, r1_ln2_w, r1_ln2_b)
    s = _residual_block_ref(s, r2_fc1_w, r2_fc1_b, r2_ln1_w, r2_ln1_b,
                            r2_fc2_w, r2_fc2_b, r2_ln2_w, r2_ln2_b)

    feat = jnp.concatenate([s, d], axis=1)
    logits = jnp.dot(feat, hz_w, precision=_HI) + hz_b
    probs = jax.nn.sigmoid(logits)
    log_hazard = jnp.log(1.0 - probs + 1e-8)
    log_survival = jnp.cumsum(log_hazard, axis=1)
    return jnp.exp(log_survival)


def reference_forward(x, params):
    surv = _reference_math(x, params)
    return [surv[:, i:i + 1] for i in range(OUT_FEATURES)]


# =============================================================================
# Parameter packing: transpose to (out, in), column biases, hazard weight split
# over [s | d], everything packed into one (rows, 128) f32 slab with 8-aligned
# row offsets (sublane-tile-aligned static slices in-kernel).
# =============================================================================
def pack_params(params):
    (dl1_ln_w, dl1_ln_b, dl1_fc_w, dl1_fc_b,
     dl2_ln_w, dl2_ln_b, dl2_fc_w, dl2_fc_b,
     proj_w, proj_b, lni_w, lni_b,
     r1_fc1_w, r1_fc1_b, r1_ln1_w, r1_ln1_b,
     r1_fc2_w, r1_fc2_b, r1_ln2_w, r1_ln2_b,
     r2_fc1_w, r2_fc1_b, r2_ln1_w, r2_ln1_b,
     r2_fc2_w, r2_fc2_b, r2_ln2_w, r2_ln2_b,
     hz_w, hz_b) = [np.asarray(p, np.float32) for p in params]

    col = lambda v: v.reshape(-1, 1)          # (1, F) -> (F, 1)
    wt = lambda w: np.ascontiguousarray(w.T)  # (in, out) -> (out, in)

    hz_wt = wt(hz_w)                          # (5, 34), cols = [s(17) | d(17)]
    tri = np.tril(np.ones((OUT_FEATURES, OUT_FEATURES), np.float32))  # cumsum

    entries = [
        ("dl1_ln_w", col(dl1_ln_w)), ("dl1_ln_b", col(dl1_ln_b)),
        ("dl1_fc_w", wt(dl1_fc_w)), ("dl1_fc_b", col(dl1_fc_b)),
        ("dl2_ln_w", col(dl2_ln_w)), ("dl2_ln_b", col(dl2_ln_b)),
        ("dl2_fc_w", wt(dl2_fc_w)), ("dl2_fc_b", col(dl2_fc_b)),
        ("proj_w", wt(proj_w)), ("proj_b", col(proj_b)),
        ("lni_w", col(lni_w)), ("lni_b", col(lni_b)),
        ("r1_fc1_w", wt(r1_fc1_w)), ("r1_fc1_b", col(r1_fc1_b)),
        ("r1_ln1_w", col(r1_ln1_w)), ("r1_ln1_b", col(r1_ln1_b)),
        ("r1_fc2_w", wt(r1_fc2_w)), ("r1_fc2_b", col(r1_fc2_b)),
        ("r1_ln2_w", col(r1_ln2_w)), ("r1_ln2_b", col(r1_ln2_b)),
        ("r2_fc1_w", wt(r2_fc1_w)), ("r2_fc1_b", col(r2_fc1_b)),
        ("r2_ln1_w", col(r2_ln1_w)), ("r2_ln1_b", col(r2_ln1_b)),
        ("r2_fc2_w", wt(r2_fc2_w)), ("r2_fc2_b", col(r2_fc2_b)),
        ("r2_ln2_w", col(r2_ln2_w)), ("r2_ln2_b", col(r2_ln2_b)),
        ("hz_w_s", hz_wt[:, :HIDDEN_DIM]),
        ("hz_w_d", hz_wt[:, HIDDEN_DIM:]),
        ("hz_b", col(hz_b)),
        ("tri", tri),
    ]

    meta = {}
    rows = 0
    for name, a in entries:
        rows = _round_up(rows, 8)             # 8-row (sublane-tile) alignment
        meta[name] = (rows, (int(a.shape[0]), int(a.shape[1])))
        rows += a.shape[0]
    total = _round_up(rows, 8)
    slab = np.zeros((total, SLAB_LANES), np.float32)
    for name, a in entries:
        off, _ = meta[name]
        slab[off:off + a.shape[0], :a.shape[1]] = a
    return slab, meta


_PACK_CACHE = {}


def _get_packed(params):
    # Cached by parameter-object identity: valid as long as the caller keeps the
    # same param arrays alive (repeated-inference serving). Packing + the H2D
    # slab copy then happen exactly once.
    key = tuple(id(a) for a in params)
    hit = _PACK_CACHE.get(key)
    if hit is not None:
        return hit
    slab_np, meta = pack_params(params)
    slab = jnp.asarray(slab_np)               # one-time host->device copy
    meta_key = tuple(sorted(meta.items()))
    _PACK_CACHE[key] = (slab, meta_key)
    return slab, meta_key


# =============================================================================
# Kernel (batch on lanes: activations are (feat, block_b))
# =============================================================================
def _ln_cols(h, w, b):
    # Single-pass LayerNorm over the feature (sublane) axis; batch on lanes.
    n = h.shape[0]
    mu = jnp.sum(h, axis=0, keepdims=True) * (1.0 / n)
    ex2 = jnp.sum(h * h, axis=0, keepdims=True) * (1.0 / n)
    var = jnp.maximum(ex2 - mu * mu, 0.0)
    return (h - mu) * jax.lax.rsqrt(var + LN_EPS) * w + b


def _multitask_kernel(x_ref, slab_ref, out_ref, *, meta):
    def p(name):
        off, (r, c) = meta[name]
        return slab_ref[off:off + r, :c]

    def dot(w, h):
        return jnp.dot(w, h, preferred_element_type=jnp.float32)

    x = x_ref[...]                                             # (9, Bb)

    # ---- DenseLayer 1: LN(9) -> ReLU -> FC(9->4) -> ReLU (dropout = id) ----
    n1 = jnp.maximum(_ln_cols(x, p("dl1_ln_w"), p("dl1_ln_b")), 0.0)
    o1 = jnp.maximum(dot(p("dl1_fc_w"), n1) + p("dl1_fc_b"), 0.0)     # (4, Bb)

    # ---- DenseLayer 2 on [x; o1] (materialized once, reused below) ----
    d1 = jnp.concatenate([x, o1], axis=0)                      # (13, Bb)
    n2 = jnp.maximum(_ln_cols(d1, p("dl2_ln_w"), p("dl2_ln_b")), 0.0)
    o2 = jnp.maximum(dot(p("dl2_fc_w"), n2) + p("dl2_fc_b"), 0.0)     # (4, Bb)

    d = jnp.concatenate([d1, o2], axis=0)                      # (17, Bb) dense out

    # ---- Shared layer: ONE projection dot + ReLU + LN ----
    s = jnp.maximum(dot(p("proj_w"), d) + p("proj_b"), 0.0)
    s = _ln_cols(s, p("lni_w"), p("lni_b"))                    # (17, Bb)

    # ---- Residual blocks ----
    def resblock(h, pre):
        o = jnp.maximum(dot(p(pre + "_fc1_w"), h) + p(pre + "_fc1_b"), 0.0)
        o = _ln_cols(o, p(pre + "_ln1_w"), p(pre + "_ln1_b"))
        o = jnp.maximum(dot(p(pre + "_fc2_w"), o) + p(pre + "_fc2_b"), 0.0)
        o = _ln_cols(o, p(pre + "_ln2_w"), p(pre + "_ln2_b"))
        return o + h

    s = resblock(s, "r1")
    s = resblock(s, "r2")                                      # (17, Bb)

    # ---- Hazard head: TWO dots over the [s | d] split ----
    logits = dot(p("hz_w_s"), s) + dot(p("hz_w_d"), d) + p("hz_b")    # (5, Bb)
    probs = jax.nn.sigmoid(logits)
    log_hazard = jnp.log(1.0 - probs + 1e-8)
    # cumsum over tasks via precomputed lower-triangular matmul (exact reference tail)
    log_survival = dot(p("tri"), log_hazard)
    out_ref[...] = jnp.exp(log_survival)                       # (5, Bb)


# =============================================================================
# Wrapper
# =============================================================================
def _choose_blocks(batch, max_block_b, n_cores):
    b128 = _round_up(max(batch, 1), 128)        # pad batch only to 128 lanes
    n_steps = _cdiv(b128, max_block_b)
    if n_cores > 1 and b128 >= 256:             # >=2 steps so both TCs work
        n_steps = max(n_steps, n_cores)
    block_b = _round_up(_cdiv(b128, n_steps), 128)
    return block_b, block_b * n_steps


@functools.lru_cache(maxsize=None)
def _build_forward(batch, block_b, b_pad, slab_rows, meta_key):
    meta = dict(meta_key)
    kernel = functools.partial(_multitask_kernel, meta=meta)
    grid = (b_pad // block_b,)

    @jax.jit
    def fwd(x, slab):
        # Batch-on-lane layout; pad/transpose stay inside the jit so XLA fuses
        # them with the kernel's neighbors.
        x_t = jnp.pad(x.T.astype(jnp.float32), ((0, 0), (0, b_pad - batch)))
        surv_t = pl.pallas_call(
            kernel,
            out_shape=jax.ShapeDtypeStruct((OUT_FEATURES, b_pad), jnp.float32),
            grid_spec=pltpu.PrefetchScalarGridSpec(
                num_scalar_prefetch=0,
                grid=grid,
                in_specs=[
                    pl.BlockSpec((IN_FEATURES, block_b), lambda i: (0, i)),
                    pl.BlockSpec((slab_rows, SLAB_LANES), lambda i: (0, 0)),
                ],
                out_specs=pl.BlockSpec((OUT_FEATURES, block_b), lambda i: (0, i)),
            ),
            compiler_params=pltpu.CompilerParams(
                dimension_semantics=("parallel",),
                vmem_limit_bytes=32 * 1024 * 1024),   # safe on v5e's 16MiB default
        )(x_t, slab)
        return surv_t[:, :batch].T                    # (B, num_tasks)

    return fwd


def multitask_forward(x, params, *, max_block_b=4096):
    B, F = x.shape
    assert F == IN_FEATURES
    slab, meta_key = _get_packed(params)
    block_b, b_pad = _choose_blocks(B, max_block_b, _NUM_TENSORCORES)
    fwd = _build_forward(B, block_b, b_pad, int(slab.shape[0]), meta_key)
    surv = fwd(x, slab)
    # mimic the PyTorch list-of-(B,1) task outputs
    return [surv[:, i:i + 1] for i in range(OUT_FEATURES)]


# =============================================================================
# Parameter init (logical layout: Linear as (in, out), LN/bias as (1, F))
# =============================================================================
def init_params(key):
    def lin(k, fan_in, fan_out):
        k1, k2 = jax.random.split(k)
        w = jax.random.normal(k1, (fan_in, fan_out), jnp.float32) / np.sqrt(fan_in)
        b = jax.random.normal(k2, (1, fan_out), jnp.float32) * 0.01
        return w, b

    def ln(f):
        return jnp.ones((1, f), jnp.float32), jnp.zeros((1, f), jnp.float32)

    keys = jax.random.split(key, 16)
    params = []
    params += list(ln(IN_FEATURES))
    params += list(lin(keys[0], IN_FEATURES, GROWTH))
    params += list(ln(C1))
    params += list(lin(keys[1], C1, GROWTH))
    params += list(lin(keys[2], DENSE_OUT, HIDDEN_DIM))
    params += list(ln(HIDDEN_DIM))
    for i in range(2):
        params += list(lin(keys[3 + 2 * i], HIDDEN_DIM, HIDDEN_DIM))
        params += list(ln(HIDDEN_DIM))
        params += list(lin(keys[4 + 2 * i], HIDDEN_DIM, HIDDEN_DIM))
        params += list(ln(HIDDEN_DIM))
    params += list(lin(keys[10], FINAL_DIM, OUT_FEATURES))
    return params


# TODO(synk): custom_loss (BCE + Markov MSE) is a training-time loss, not part
# of the forward pass, so it is not implemented in the kernel.

if __name__ == "__main__":
    key = jax.random.PRNGKey(0)
    kx, kp = jax.random.split(key)
    params = init_params(kp)

    # Small batch (single grid step) and a non-128-multiple batch (exercises the
    # 128-lane padding and, on 2-TC chips, the 2-step megacore split).
    for batch in (16, 200):
        x = jax.random.normal(jax.random.fold_in(kx, batch),
                              (batch, IN_FEATURES), dtype=jnp.float32)
        outs = jax.block_until_ready(multitask_forward(x, params))
        ref = reference_forward(x, params)
        for o, r in zip(outs, ref):
            np.testing.assert_allclose(np.asarray(o), np.asarray(r),
                                       rtol=1e-5, atol=1e-5)

    print("KERNEL_OK")
</pallas_src>

<mosaic_0001>
module attributes {stable_mosaic.version = 11 : i64} {
  func.func @_multitask_kernel(%arg0: i32, %arg1: memref<9x128xf32, #tpu.memory_space<vmem>>, %arg2: memref<608x128xf32, #tpu.memory_space<vmem>>, %arg3: memref<5x128xf32, #tpu.memory_space<vmem>>) attributes {dimension_semantics = [#tpu.dimension_semantics<parallel>], iteration_bounds = array<i64: 1>, scalar_prefetch = 0 : i64, scratch_operands = 0 : i64, tpu.core_type = #tpu.core_type<tc>, window_params = [{transform_indices = @transform_0, window_bounds = array<i64: 9, 128>}, {pipeline_mode = #tpu.pipeline_mode<synchronous>, transform_indices = @transform_1, window_bounds = array<i64: 608, 128>}, {transform_indices = @transform_2, window_bounds = array<i64: 5, 128>}]} {
    %c0 = arith.constant 0 : index
    %c0_0 = arith.constant 0 : index
    %0 = vector.load %arg1[%c0, %c0_0] : memref<9x128xf32, #tpu.memory_space<vmem>>, vector<9x128xf32>
    %c0_1 = arith.constant 0 : index
    %c0_2 = arith.constant 0 : index
    %1 = vector.load %arg2[%c0_1, %c0_2] : memref<608x128xf32, #tpu.memory_space<vmem>>, vector<9x1xf32>
    %c16 = arith.constant 16 : index
    %c0_3 = arith.constant 0 : index
    %2 = vector.load %arg2[%c16, %c0_3] : memref<608x128xf32, #tpu.memory_space<vmem>>, vector<9x1xf32>
    %cst = arith.constant dense<0.000000e+00> : vector<128xf32>
    %3 = vector.multi_reduction <add>, %0, %cst [0] : vector<9x128xf32> to vector<128xf32>
    %4 = vector.shape_cast %3 : vector<128xf32> to vector<1x128xf32>
    %cst_4 = arith.constant 0.111111112 : f32
    %5 = vector.broadcast %cst_4 : f32 to vector<1x128xf32>
    %6 = arith.mulf %4, %5 : vector<1x128xf32>
    %7 = arith.mulf %0, %0 : vector<9x128xf32>
    %cst_5 = arith.constant dense<0.000000e+00> : vector<128xf32>
    %8 = vector.multi_reduction <add>, %7, %cst_5 [0] : vector<9x128xf32> to vector<128xf32>
    %9 = vector.shape_cast %8 : vector<128xf32> to vector<1x128xf32>
    %cst_6 = arith.constant 0.111111112 : f32
    %10 = vector.broadcast %cst_6 : f32 to vector<1x128xf32>
    %11 = arith.mulf %9, %10 : vector<1x128xf32>
    %12 = arith.mulf %6, %6 : vector<1x128xf32>
    %13 = arith.subf %11, %12 : vector<1x128xf32>
    %cst_7 = arith.constant 0.000000e+00 : f32
    %14 = vector.broadcast %cst_7 : f32 to vector<1x128xf32>
    %15 = arith.maximumf %13, %14 : vector<1x128xf32>
    %16 = vector.broadcast %6 : vector<1x128xf32> to vector<9x128xf32>
    %17 = arith.subf %0, %16 : vector<9x128xf32>
    %cst_8 = arith.constant 9.99999974E-6 : f32
    %18 = vector.broadcast %cst_8 : f32 to vector<1x128xf32>
    %19 = arith.addf %15, %18 : vector<1x128xf32>
    %20 = math.rsqrt %19 : vector<1x128xf32>
    %21 = vector.broadcast %20 : vector<1x128xf32> to vector<9x128xf32>
    %22 = arith.mulf %17, %21 : vector<9x128xf32>
    %23 = vector.broadcast %1 : vector<9x1xf32> to vector<9x128xf32>
    %24 = arith.mulf %22, %23 : vector<9x128xf32>
    %25 = vector.broadcast %2 : vector<9x1xf32> to vector<9x128xf32>
    %26 = arith.addf %24, %25 : vector<9x128xf32>
    %cst_9 = arith.constant 0.000000e+00 : f32
    %27 = vector.broadcast %cst_9 : f32 to vector<9x128xf32>
    %28 = arith.maximumf %26, %27 : vector<9x128xf32>
    %c32 = arith.constant 32 : index
    %c0_10 = arith.constant 0 : index
    %29 = vector.load %arg2[%c32, %c0_10] : memref<608x128xf32, #tpu.memory_space<vmem>>, vector<4x9xf32>
    %cst_11 = arith.constant dense<0.000000e+00> : vector<4x128xf32>
    %30 = tpu.matmul %29, %28, %cst_11 {dimension_numbers = #tpu.dot_dimension_numbers<[1], [0], [0], [1], [0, 0, 1, 1], [], []>} : vector<4x9xf32>, vector<9x128xf32>, vector<4x128xf32> -> vector<4x128xf32>
    %c40 = arith.constant 40 : index
    %c0_12 = arith.constant 0 : index
    %31 = vector.load %arg2[%c40, %c0_12] : memref<608x128xf32, #tpu.memory_space<vmem>>, vector<4x1xf32>
    %32 = vector.broadcast %31 : vector<4x1xf32> to vector<4x128xf32>
    %33 = arith.addf %30, %32 : vector<4x128xf32>
    %cst_13 = arith.constant 0.000000e+00 : f32
    %34 = vector.broadcast %cst_13 : f32 to vector<4x128xf32>
    %35 = arith.maximumf %33, %34 : vector<4x128xf32>
    %36 = tpu.concatenate %0, %35 in 0 : vector<9x128xf32>, vector<4x128xf32> -> vector<13x128xf32>
    %c48 = arith.constant 48 : index
    %c0_14 = arith.constant 0 : index
    %37 = vector.load %arg2[%c48, %c0_14] : memref<608x128xf32, #tpu.memory_space<vmem>>, vector<13x1xf32>
    %c64 = arith.constant 64 : index
    %c0_15 = arith.constant 0 : index
    %38 = vector.load %arg2[%c64, %c0_15] : memref<608x128xf32, #tpu.memory_space<vmem>>, vector<13x1xf32>
    %cst_16 = arith.constant dense<0.000000e+00> : vector<128xf32>
    %39 = vector.multi_reduction <add>, %36, %cst_16 [0] : vector<13x128xf32> to vector<128xf32>
    %40 = vector.shape_cast %39 : vector<128xf32> to vector<1x128xf32>
    %cst_17 = arith.constant 0.0769230798 : f32
    %41 = vector.broadcast %cst_17 : f32 to vector<1x128xf32>
    %42 = arith.mulf %40, %41 : vector<1x128xf32>
    %43 = arith.mulf %36, %36 : vector<13x128xf32>
    %cst_18 = arith.constant dense<0.000000e+00> : vector<128xf32>
    %44 = vector.multi_reduction <add>, %43, %cst_18 [0] : vector<13x128xf32> to vector<128xf32>
    %45 = vector.shape_cast %44 : vector<128xf32> to vector<1x128xf32>
    %cst_19 = arith.constant 0.0769230798 : f32
    %46 = vector.broadcast %cst_19 : f32 to vector<1x128xf32>
    %47 = arith.mulf %45, %46 : vector<1x128xf32>
    %48 = arith.mulf %42, %42 : vector<1x128xf32>
    %49 = arith.subf %47, %48 : vector<1x128xf32>
    %cst_20 = arith.constant 0.000000e+00 : f32
    %50 = vector.broadcast %cst_20 : f32 to vector<1x128xf32>
    %51 = arith.maximumf %49, %50 : vector<1x128xf32>
    %52 = vector.broadcast %42 : vector<1x128xf32> to vector<13x128xf32>
    %53 = arith.subf %36, %52 : vector<13x128xf32>
    %cst_21 = arith.constant 9.99999974E-6 : f32
    %54 = vector.broadcast %cst_21 : f32 to vector<1x128xf32>
    %55 = arith.addf %51, %54 : vector<1x128xf32>
    %56 = math.rsqrt %55 : vector<1x128xf32>
    %57 = vector.broadcast %56 : vector<1x128xf32> to vector<13x128xf32>
    %58 = arith.mulf %53, %57 : vector<13x128xf32>
    %59 = vector.broadcast %37 : vector<13x1xf32> to vector<13x128xf32>
    %60 = arith.mulf %58, %59 : vector<13x128xf32>
    %61 = vector.broadcast %38 : vector<13x1xf32> to vector<13x128xf32>
    %62 = arith.addf %60, %61 : vector<13x128xf32>
    %cst_22 = arith.constant 0.000000e+00 : f32
    %63 = vector.broadcast %cst_22 : f32 to vector<13x128xf32>
    %64 = arith.maximumf %62, %63 : vector<13x128xf32>
    %c80 = arith.constant 80 : index
    %c0_23 = arith.constant 0 : index
    %65 = vector.load %arg2[%c80, %c0_23] : memref<608x128xf32, #tpu.memory_space<vmem>>, vector<4x13xf32>
    %cst_24 = arith.constant dense<0.000000e+00> : vector<4x128xf32>
    %66 = tpu.matmul %65, %64, %cst_24 {dimension_numbers = #tpu.dot_dimension_numbers<[1], [0], [0], [1], [0, 0, 1, 1], [], []>} : vector<4x13xf32>, vector<13x128xf32>, vector<4x128xf32> -> vector<4x128xf32>
    %c88 = arith.constant 88 : index
    %c0_25 = arith.constant 0 : index
    %67 = vector.load %arg2[%c88, %c0_25] : memref<608x128xf32, #tpu.memory_space<vmem>>, vector<4x1xf32>
    %68 = vector.broadcast %67 : vector<4x1xf32> to vector<4x128xf32>
    %69 = arith.addf %66, %68 : vector<4x128xf32>
    %cst_26 = arith.constant 0.000000e+00 : f32
    %70 = vector.broadcast %cst_26 : f32 to vector<4x128xf32>
    %71 = arith.maximumf %69, %70 : vector<4x128xf32>
    %72 = tpu.concatenate %36, %71 in 0 : vector<13x128xf32>, vector<4x128xf32> -> vector<17x128xf32>
    %c96 = arith.constant 96 : index
    %c0_27 = arith.constant 0 : index
    %73 = vector.load %arg2[%c96, %c0_27] : memref<608x128xf32, #tpu.memory_space<vmem>>, vector<17x17xf32>
    %cst_28 = arith.constant dense<0.000000e+00> : vector<17x128xf32>
    %74 = tpu.matmul %73, %72, %cst_28 {dimension_numbers = #tpu.dot_dimension_numbers<[1], [0], [0], [1], [0, 0, 1, 1], [], []>} : vector<17x17xf32>, vector<17x128xf32>, vector<17x128xf32> -> vector<17x128xf32>
    %c120 = arith.constant 120 : index
    %c0_29 = arith.constant 0 : index
    %75 = vector.load %arg2[%c120, %c0_29] : memref<608x128xf32, #tpu.memory_space<vmem>>, vector<17x1xf32>
    %76 = vector.broadcast %75 : vector<17x1xf32> to vector<17x128xf32>
    %77 = arith.addf %74, %76 : vector<17x128xf32>
    %cst_30 = arith.constant 0.000000e+00 : f32
    %78 = vector.broadcast %cst_30 : f32 to vector<17x128xf32>
    %79 = arith.maximumf %77, %78 : vector<17x128xf32>
    %c144 = arith.constant 144 : index
    %c0_31 = arith.constant 0 : index
    %80 = vector.load %arg2[%c144, %c0_31] : memref<608x128xf32, #tpu.memory_space<vmem>>, vector<17x1xf32>
    %c168 = arith.constant 168 : index
    %c0_32 = arith.constant 0 : index
    %81 = vector.load %arg2[%c168, %c0_32] : memref<608x128xf32, #tpu.memory_space<vmem>>, vector<17x1xf32>
    %cst_33 = arith.constant dense<0.000000e+00> : vector<128xf32>
    %82 = vector.multi_reduction <add>, %79, %cst_33 [0] : vector<17x128xf32> to vector<128xf32>
    %83 = vector.shape_cast %82 : vector<128xf32> to vector<1x128xf32>
    %cst_34 = arith.constant 0.0588235296 : f32
    %84 = vector.broadcast %cst_34 : f32 to vector<1x128xf32>
    %85 = arith.mulf %83, %84 : vector<1x128xf32>
    %86 = arith.mulf %79, %79 : vector<17x128xf32>
    %cst_35 = arith.constant dense<0.000000e+00> : vector<128xf32>
    %87 = vector.multi_reduction <add>, %86, %cst_35 [0] : vector<17x128xf32> to vector<128xf32>
    %88 = vector.shape_cast %87 : vector<128xf32> to vector<1x128xf32>
    %cst_36 = arith.constant 0.0588235296 : f32
    %89 = vector.broadcast %cst_36 : f32 to vector<1x128xf32>
    %90 = arith.mulf %88, %89 : vector<1x128xf32>
    %91 = arith.mulf %85, %85 : vector<1x128xf32>
    %92 = arith.subf %90, %91 : vector<1x128xf32>
    %cst_37 = arith.constant 0.000000e+00 : f32
    %93 = vector.broadcast %cst_37 : f32 to vector<1x128xf32>
    %94 = arith.maximumf %92, %93 : vector<1x128xf32>
    %95 = vector.broadcast %85 : vector<1x128xf32> to vector<17x128xf32>
    %96 = arith.subf %79, %95 : vector<17x128xf32>
    %cst_38 = arith.constant 9.99999974E-6 : f32
    %97 = vector.broadcast %cst_38 : f32 to vector<1x128xf32>
    %98 = arith.addf %94, %97 : vector<1x128xf32>
    %99 = math.rsqrt %98 : vector<1x128xf32>
    %100 = vector.broadcast %99 : vector<1x128xf32> to vector<17x128xf32>
    %101 = arith.mulf %96, %100 : vector<17x128xf32>
    %102 = vector.broadcast %80 : vector<17x1xf32> to vector<17x128xf32>
    %103 = arith.mulf %101, %102 : vector<17x128xf32>
    %104 = vector.broadcast %81 : vector<17x1xf32> to vector<17x128xf32>
    %105 = arith.addf %103, %104 : vector<17x128xf32>
    %c192 = arith.constant 192 : index
    %c0_39 = arith.constant 0 : index
    %106 = vector.load %arg2[%c192, %c0_39] : memref<608x128xf32, #tpu.memory_space<vmem>>, vector<17x17xf32>
    %cst_40 = arith.constant dense<0.000000e+00> : vector<17x128xf32>
    %107 = tpu.matmul %106, %105, %cst_40 {dimension_numbers = #tpu.dot_dimension_numbers<[1], [0], [0], [1], [0, 0, 1, 1], [], []>} : vector<17x17xf32>, vector<17x128xf32>, vector<17x128xf32> -> vector<17x128xf32>
    %c216 = arith.constant 216 : index
    %c0_41 = arith.constant 0 : index
    %108 = vector.load %arg2[%c216, %c0_41] : memref<608x128xf32, #tpu.memory_space<vmem>>, vector<17x1xf32>
    %109 = vector.broadcast %108 : vector<17x1xf32> to vector<17x128xf32>
    %110 = arith.addf %107, %109 : vector<17x128xf32>
    %cst_42 = arith.constant 0.000000e+00 : f32
    %111 = vector.broadcast %cst_42 : f32 to vector<17x128xf32>
    %112 = arith.maximumf %110, %111 : vector<17x128xf32>
    %c240 = arith.constant 240 : index
    %c0_43 = arith.constant 0 : index
    %113 = vector.load %arg2[%c240, %c0_43] : memref<608x128xf32, #tpu.memory_space<vmem>>, vector<17x1xf32>
    %c264 = arith.constant 264 : index
    %c0_44 = arith.constant 0 : index
    %114 = vector.load %arg2[%c264, %c0_44] : memref<608x128xf32, #tpu.memory_space<vmem>>, vector<17x1xf32>
    %cst_45 = arith.constant dense<0.000000e+00> : vector<128xf32>
    %115 = vector.multi_reduction <add>, %112, %cst_45 [0] : vector<17x128xf32> to vector<128xf32>
    %116 = vector.shape_cast %115 : vector<128xf32> to vector<1x128xf32>
    %cst_46 = arith.constant 0.0588235296 : f32
    %117 = vector.broadcast %cst_46 : f32 to vector<1x128xf32>
    %118 = arith.mulf %116, %117 : vector<1x128xf32>
    %119 = arith.mulf %112, %112 : vector<17x128xf32>
    %cst_47 = arith.constant dense<0.000000e+00> : vector<128xf32>
    %120 = vector.multi_reduction <add>, %119, %cst_47 [0] : vector<17x128xf32> to vector<128xf32>
    %121 = vector.shape_cast %120 : vector<128xf32> to vector<1x128xf32>
    %cst_48 = arith.constant 0.0588235296 : f32
    %122 = vector.broadcast %cst_48 : f32 to vector<1x128xf32>
    %123 = arith.mulf %121, %122 : vector<1x128xf32>
    %124 = arith.mulf %118, %118 : vector<1x128xf32>
    %125 = arith.subf %123, %124 : vector<1x128xf32>
    %cst_49 = arith.constant 0.000000e+00 : f32
    %126 = vector.broadcast %cst_49 : f32 to vector<1x128xf32>
    %127 = arith.maximumf %125, %126 : vector<1x128xf32>
    %128 = vector.broadcast %118 : vector<1x128xf32> to vector<17x128xf32>
    %129 = arith.subf %112, %128 : vector<17x128xf32>
    %cst_50 = arith.constant 9.99999974E-6 : f32
    %130 = vector.broadcast %cst_50 : f32 to vector<1x128xf32>
    %131 = arith.addf %127, %130 : vector<1x128xf32>
    %132 = math.rsqrt %131 : vector<1x128xf32>
    %133 = vector.broadcast %132 : vector<1x128xf32> to vector<17x128xf32>
    %134 = arith.mulf %129, %133 : vector<17x128xf32>
    %135 = vector.broadcast %113 : vector<17x1xf32> to vector<17x128xf32>
    %136 = arith.mulf %134, %135 : vector<17x128xf32>
    %137 = vector.broadcast %114 : vector<17x1xf32> to vector<17x128xf32>
    %138 = arith.addf %136, %137 : vector<17x128xf32>
    %c288 = arith.constant 288 : index
    %c0_51 = arith.constant 0 : index
    %139 = vector.load %arg2[%c288, %c0_51] : memref<608x128xf32, #tpu.memory_space<vmem>>, vector<17x17xf32>
    %cst_52 = arith.constant dense<0.000000e+00> : vector<17x128xf32>
    %140 = tpu.matmul %139, %138, %cst_52 {dimension_numbers = #tpu.dot_dimension_numbers<[1], [0], [0], [1], [0, 0, 1, 1], [], []>} : vector<17x17xf32>, vector<17x128xf32>, vector<17x128xf32> -> vector<17x128xf32>
    %c312 = arith.constant 312 : index
    %c0_53 = arith.constant 0 : index
    %141 = vector.load %arg2[%c312, %c0_53] : memref<608x128xf32, #tpu.memory_space<vmem>>, vector<17x1xf32>
    %142 = vector.broadcast %141 : vector<17x1xf32> to vector<17x128xf32>
    %143 = arith.addf %140, %142 : vector<17x128xf32>
    %cst_54 = arith.constant 0.000000e+00 : f32
    %144 = vector.broadcast %cst_54 : f32 to vector<17x128xf32>
    %145 = arith.maximumf %143, %144 : vector<17x128xf32>
    %c336 = arith.constant 336 : index
    %c0_55 = arith.constant 0 : index
    %146 = vector.load %arg2[%c336, %c0_55] : memref<608x128xf32, #tpu.memory_space<vmem>>, vector<17x1xf32>
    %c360 = arith.constant 360 : index
    %c0_56 = arith.constant 0 : index
    %147 = vector.load %arg2[%c360, %c0_56] : memref<608x128xf32, #tpu.memory_space<vmem>>, vector<17x1xf32>
    %cst_57 = arith.constant dense<0.000000e+00> : vector<128xf32>
    %148 = vector.multi_reduction <add>, %145, %cst_57 [0] : vector<17x128xf32> to vector<128xf32>
    %149 = vector.shape_cast %148 : vector<128xf32> to vector<1x128xf32>
    %cst_58 = arith.constant 0.0588235296 : f32
    %150 = vector.broadcast %cst_58 : f32 to vector<1x128xf32>
    %151 = arith.mulf %149, %150 : vector<1x128xf32>
    %152 = arith.mulf %145, %145 : vector<17x128xf32>
    %cst_59 = arith.constant dense<0.000000e+00> : vector<128xf32>
    %153 = vector.multi_reduction <add>, %152, %cst_59 [0] : vector<17x128xf32> to vector<128xf32>
    %154 = vector.shape_cast %153 : vector<128xf32> to vector<1x128xf32>
    %cst_60 = arith.constant 0.0588235296 : f32
    %155 = vector.broadcast %cst_60 : f32 to vector<1x128xf32>
    %156 = arith.mulf %154, %155 : vector<1x128xf32>
    %157 = arith.mulf %151, %151 : vector<1x128xf32>
    %158 = arith.subf %156, %157 : vector<1x128xf32>
    %cst_61 = arith.constant 0.000000e+00 : f32
    %159 = vector.broadcast %cst_61 : f32 to vector<1x128xf32>
    %160 = arith.maximumf %158, %159 : vector<1x128xf32>
    %161 = vector.broadcast %151 : vector<1x128xf32> to vector<17x128xf32>
    %162 = arith.subf %145, %161 : vector<17x128xf32>
    %cst_62 = arith.constant 9.99999974E-6 : f32
    %163 = vector.broadcast %cst_62 : f32 to vector<1x128xf32>
    %164 = arith.addf %160, %163 : vector<1x128xf32>
    %165 = math.rsqrt %164 : vector<1x128xf32>
    %166 = vector.broadcast %165 : vector<1x128xf32> to vector<17x128xf32>
    %167 = arith.mulf %162, %166 : vector<17x128xf32>
    %168 = vector.broadcast %146 : vector<17x1xf32> to vector<17x128xf32>
    %169 = arith.mulf %167, %168 : vector<17x128xf32>
    %170 = vector.broadcast %147 : vector<17x1xf32> to vector<17x128xf32>
    %171 = arith.addf %169, %170 : vector<17x128xf32>
    %172 = arith.addf %171, %105 : vector<17x128xf32>
    %c384 = arith.constant 384 : index
    %c0_63 = arith.constant 0 : index
    %173 = vector.load %arg2[%c384, %c0_63] : memref<608x128xf32, #tpu.memory_space<vmem>>, vector<17x17xf32>
    %cst_64 = arith.constant dense<0.000000e+00> : vector<17x128xf32>
    %174 = tpu.matmul %173, %172, %cst_64 {dimension_numbers = #tpu.dot_dimension_numbers<[1], [0], [0], [1], [0, 0, 1, 1], [], []>} : vector<17x17xf32>, vector<17x128xf32>, vector<17x128xf32> -> vector<17x128xf32>
    %c408 = arith.constant 408 : index
    %c0_65 = arith.constant 0 : index
    %175 = vector.load %arg2[%c408, %c0_65] : memref<608x128xf32, #tpu.memory_space<vmem>>, vector<17x1xf32>
    %176 = vector.broadcast %175 : vector<17x1xf32> to vector<17x128xf32>
    %177 = arith.addf %174, %176 : vector<17x128xf32>
    %cst_66 = arith.constant 0.000000e+00 : f32
    %178 = vector.broadcast %cst_66 : f32 to vector<17x128xf32>
    %179 = arith.maximumf %177, %178 : vector<17x128xf32>
    %c432 = arith.constant 432 : index
    %c0_67 = arith.constant 0 : index
    %180 = vector.load %arg2[%c432, %c0_67] : memref<608x128xf32, #tpu.memory_space<vmem>>, vector<17x1xf32>
    %c456 = arith.constant 456 : index
    %c0_68 = arith.constant 0 : index
    %181 = vector.load %arg2[%c456, %c0_68] : memref<608x128xf32, #tpu.memory_space<vmem>>, vector<17x1xf32>
    %cst_69 = arith.constant dense<0.000000e+00> : vector<128xf32>
    %182 = vector.multi_reduction <add>, %179, %cst_69 [0] : vector<17x128xf32> to vector<128xf32>
    %183 = vector.shape_cast %182 : vector<128xf32> to vector<1x128xf32>
    %cst_70 = arith.constant 0.0588235296 : f32
    %184 = vector.broadcast %cst_70 : f32 to vector<1x128xf32>
    %185 = arith.mulf %183, %184 : vector<1x128xf32>
    %186 = arith.mulf %179, %179 : vector<17x128xf32>
    %cst_71 = arith.constant dense<0.000000e+00> : vector<128xf32>
    %187 = vector.multi_reduction <add>, %186, %cst_71 [0] : vector<17x128xf32> to vector<128xf32>
    %188 = vector.shape_cast %187 : vector<128xf32> to vector<1x128xf32>
    %cst_72 = arith.constant 0.0588235296 : f32
    %189 = vector.broadcast %cst_72 : f32 to vector<1x128xf32>
    %190 = arith.mulf %188, %189 : vector<1x128xf32>
    %191 = arith.mulf %185, %185 : vector<1x128xf32>
    %192 = arith.subf %190, %191 : vector<1x128xf32>
    %cst_73 = arith.constant 0.000000e+00 : f32
    %193 = vector.broadcast %cst_73 : f32 to vector<1x128xf32>
    %194 = arith.maximumf %192, %193 : vector<1x128xf32>
    %195 = vector.broadcast %185 : vector<1x128xf32> to vector<17x128xf32>
    %196 = arith.subf %179, %195 : vector<17x128xf32>
    %cst_74 = arith.constant 9.99999974E-6 : f32
    %197 = vector.broadcast %cst_74 : f32 to vector<1x128xf32>
    %198 = arith.addf %194, %197 : vector<1x128xf32>
    %199 = math.rsqrt %198 : vector<1x128xf32>
    %200 = vector.broadcast %199 : vector<1x128xf32> to vector<17x128xf32>
    %201 = arith.mulf %196, %200 : vector<17x128xf32>
    %202 = vector.broadcast %180 : vector<17x1xf32> to vector<17x128xf32>
    %203 = arith.mulf %201, %202 : vector<17x128xf32>
    %204 = vector.broadcast %181 : vector<17x1xf32> to vector<17x128xf32>
    %205 = arith.addf %203, %204 : vector<17x128xf32>
    %c480 = arith.constant 480 : index
    %c0_75 = arith.constant 0 : index
    %206 = vector.load %arg2[%c480, %c0_75] : memref<608x128xf32, #tpu.memory_space<vmem>>, vector<17x17xf32>
    %cst_76 = arith.constant dense<0.000000e+00> : vector<17x128xf32>
    %207 = tpu.matmul %206, %205, %cst_76 {dimension_numbers = #tpu.dot_dimension_numbers<[1], [0], [0], [1], [0, 0, 1, 1], [], []>} : vector<17x17xf32>, vector<17x128xf32>, vector<17x128xf32> -> vector<17x128xf32>
    %c504 = arith.constant 504 : index
    %c0_77 = arith.constant 0 : index
    %208 = vector.load %arg2[%c504, %c0_77] : memref<608x128xf32, #tpu.memory_space<vmem>>, vector<17x1xf32>
    %209 = vector.broadcast %208 : vector<17x1xf32> to vector<17x128xf32>
    %210 = arith.addf %207, %209 : vector<17x128xf32>
    %cst_78 = arith.constant 0.000000e+00 : f32
    %211 = vector.broadcast %cst_78 : f32 to vector<17x128xf32>
    %212 = arith.maximumf %210, %211 : vector<17x128xf32>
    %c528 = arith.constant 528 : index
    %c0_79 = arith.constant 0 : index
    %213 = vector.load %arg2[%c528, %c0_79] : memref<608x128xf32, #tpu.memory_space<vmem>>, vector<17x1xf32>
    %c552 = arith.constant 552 : index
    %c0_80 = arith.constant 0 : index
    %214 = vector.load %arg2[%c552, %c0_80] : memref<608x128xf32, #tpu.memory_space<vmem>>, vector<17x1xf32>
    %cst_81 = arith.constant dense<0.000000e+00> : vector<128xf32>
    %215 = vector.multi_reduction <add>, %212, %cst_81 [0] : vector<17x128xf32> to vector<128xf32>
    %216 = vector.shape_cast %215 : vector<128xf32> to vector<1x128xf32>
    %cst_82 = arith.constant 0.0588235296 : f32
    %217 = vector.broadcast %cst_82 : f32 to vector<1x128xf32>
    %218 = arith.mulf %216, %217 : vector<1x128xf32>
    %219 = arith.mulf %212, %212 : vector<17x128xf32>
    %cst_83 = arith.constant dense<0.000000e+00> : vector<128xf32>
    %220 = vector.multi_reduction <add>, %219, %cst_83 [0] : vector<17x128xf32> to vector<128xf32>
    %221 = vector.shape_cast %220 : vector<128xf32> to vector<1x128xf32>
    %cst_84 = arith.constant 0.0588235296 : f32
    %222 = vector.broadcast %cst_84 : f32 to vector<1x128xf32>
    %223 = arith.mulf %221, %222 : vector<1x128xf32>
    %224 = arith.mulf %218, %218 : vector<1x128xf32>
    %225 = arith.subf %223, %224 : vector<1x128xf32>
    %cst_85 = arith.constant 0.000000e+00 : f32
    %226 = vector.broadcast %cst_85 : f32 to vector<1x128xf32>
    %227 = arith.maximumf %225, %226 : vector<1x128xf32>
    %228 = vector.broadcast %218 : vector<1x128xf32> to vector<17x128xf32>
    %229 = arith.subf %212, %228 : vector<17x128xf32>
    %cst_86 = arith.constant 9.99999974E-6 : f32
    %230 = vector.broadcast %cst_86 : f32 to vector<1x128xf32>
    %231 = arith.addf %227, %230 : vector<1x128xf32>
    %232 = math.rsqrt %231 : vector<1x128xf32>
    %233 = vector.broadcast %232 : vector<1x128xf32> to vector<17x128xf32>
    %234 = arith.mulf %229, %233 : vector<17x128xf32>
    %235 = vector.broadcast %213 : vector<17x1xf32> to vector<17x128xf32>
    %236 = arith.mulf %234, %235 : vector<17x128xf32>
    %237 = vector.broadcast %214 : vector<17x1xf32> to vector<17x128xf32>
    %238 = arith.addf %236, %237 : vector<17x128xf32>
    %239 = arith.addf %238, %172 : vector<17x128xf32>
    %c576 = arith.constant 576 : index
    %c0_87 = arith.constant 0 : index
    %240 = vector.load %arg2[%c576, %c0_87] : memref<608x128xf32, #tpu.memory_space<vmem>>, vector<5x17xf32>
    %cst_88 = arith.constant dense<0.000000e+00> : vector<5x128xf32>
    %241 = tpu.matmul %240, %239, %cst_88 {dimension_numbers = #tpu.dot_dimension_numbers<[1], [0], [0], [1], [0, 0, 1, 1], [], []>} : vector<5x17xf32>, vector<17x128xf32>, vector<5x128xf32> -> vector<5x128xf32>
    %c584 = arith.constant 584 : index
    %c0_89 = arith.constant 0 : index
    %242 = vector.load %arg2[%c584, %c0_89] : memref<608x128xf32, #tpu.memory_space<vmem>>, vector<5x17xf32>
    %cst_90 = arith.constant dense<0.000000e+00> : vector<5x128xf32>
    %243 = tpu.matmul %242, %72, %cst_90 {dimension_numbers = #tpu.dot_dimension_numbers<[1], [0], [0], [1], [0, 0, 1, 1], [], []>} : vector<5x17xf32>, vector<17x128xf32>, vector<5x128xf32> -> vector<5x128xf32>
    %244 = arith.addf %241, %243 : vector<5x128xf32>
    %c592 = arith.constant 592 : index
    %c0_91 = arith.constant 0 : index
    %245 = vector.load %arg2[%c592, %c0_91] : memref<608x128xf32, #tpu.memory_space<vmem>>, vector<5x1xf32>
    %246 = vector.broadcast %245 : vector<5x1xf32> to vector<5x128xf32>
    %247 = arith.addf %244, %246 : vector<5x128xf32>
    %248 = arith.negf %247 : vector<5x128xf32>
    %249 = math.exp %248 : vector<5x128xf32>
    %cst_92 = arith.constant 1.000000e+00 : f32
    %250 = vector.broadcast %cst_92 : f32 to vector<5x128xf32>
    %251 = arith.addf %250, %249 : vector<5x128xf32>
    %252 = arith.divf %250, %251 : vector<5x128xf32>
    %cst_93 = arith.constant 1.000000e+00 : f32
    %253 = vector.broadcast %cst_93 : f32 to vector<5x128xf32>
    %254 = arith.subf %253, %252 : vector<5x128xf32>
    %cst_94 = arith.constant 9.99999993E-9 : f32
    %255 = vector.broadcast %cst_94 : f32 to vector<5x128xf32>
    %256 = arith.addf %254, %255 : vector<5x128xf32>
    %257 = math.log %256 : vector<5x128xf32>
    %c600 = arith.constant 600 : index
    %c0_95 = arith.constant 0 : index
    %258 = vector.load %arg2[%c600, %c0_95] : memref<608x128xf32, #tpu.memory_space<vmem>>, vector<5x5xf32>
    %cst_96 = arith.constant dense<0.000000e+00> : vector<5x128xf32>
    %259 = tpu.matmul %258, %257, %cst_96 {dimension_numbers = #tpu.dot_dimension_numbers<[1], [0], [0], [1], [0, 0, 1, 1], [], []>} : vector<5x5xf32>, vector<5x128xf32>, vector<5x128xf32> -> vector<5x128xf32>
    %260 = math.exp %259 : vector<5x128xf32>
    %c0_97 = arith.constant 0 : index
    %c0_98 = arith.constant 0 : index
    %261 = vector.load %arg3[%c0_97, %c0_98] : memref<5x128xf32, #tpu.memory_space<vmem>>, vector<5x128xf32>
    tpu.vector_store %arg3[%c0_97, %c0_98], %260 {strides = array<i32>} : memref<5x128xf32, #tpu.memory_space<vmem>>, vector<5x128xf32>,
    return
  }
  func.func @transform_0(%arg0: i32) -> (i32, i32) {
    %c0_i32 = arith.constant 0 : i32
    %c0_i32_0 = arith.constant 0 : i32
    return %c0_i32, %arg0 : i32, i32
  }
  func.func @transform_1(%arg0: i32) -> (i32, i32) {
    %c0_i32 = arith.constant 0 : i32
    %c0_i32_0 = arith.constant 0 : i32
    %c0_i32_1 = arith.constant 0 : i32
    return %c0_i32, %c0_i32_0 : i32, i32
  }
  func.func @transform_2(%arg0: i32) -> (i32, i32) {
    %c0_i32 = arith.constant 0 : i32
    %c0_i32_0 = arith.constant 0 : i32
    return %c0_i32, %arg0 : i32, i32
  }
}

</mosaic_0001>

<llo_original>
// kernel: fwd.1
$region0: #{fwd.1}
  #allocation0 [shape = 'u32[]', space=smem, size = 0x4, offset = 0x4, fixed_abs, tag = 'smem constant byte address 0x4 - core index']
  #allocation1 [shape = 'u32[144,128]{1,0:T(1,128)}', space=vmem, size = 0x12000, scoped, tag = 'internal scratch']
  %s0 = inlined_call_operand.vmem [shape: f32[9,128], index: 0, kind: input, shape index: {}]
  %s1 = inlined_call_operand.hbm [shape: f32[608,128], index: 1, kind: input, shape index: {}]
  %s2 = inlined_call_operand.vmem [shape: f32[5,128], index: 2, kind: output, shape index: {}]
  %s3 = sld [smem:[#allocation0]]
  $region22: #{fwd.1} parent=0
    _
  %s5 = ssub.s32 1, %s3
  %s6 = scalar_select 0, %s5, %s3
  $region1: #{fwd.1} parent=0
    #allocation2 [shape = 'u8[311296]{0}', space=vmem, size = 0x4c000, scoped, tag = 'input window, operand 1, single buffered']
    #allocation3 [shape = 's32[1]{0}', space=sflag, size = 0x4, scoped, tag = 'scoped memory for fwd.1']
    %7 = vsyncpa [#allocation3], 0
    // Predicated region
    $region2: #{fwd.1} parent=1 // pred_check
      _
    $region3: #{fwd.1} parent=1 // pred_check_branch
      %9 = sbr.rel (0) target = $region5
    $region4: #{fwd.1} parent=1 // pred_region
      _
    $region5: #{fwd.1} parent=1 // pred_fallthru
      _
    // Predicated region
    $region6: #{fwd.1} parent=1 // pred_check
      _
    $region7: #{fwd.1} parent=1 // pred_check_branch
      %11 = sbr.rel (0) target = $region9
    $region8: #{fwd.1} parent=1 // pred_region
      %s13 = ssub.s32 9728, 9728
      %14 = vsyncadd [#allocation3], %s13
      %s15 = sshll.u32 [#allocation2], 4
      %s16 = int_to_ptr.vmem [resolvable:$true] %s15
      %21 = dma.hbm_to_vmem [thread:$0]  %s1, 9728, %s16, [#allocation3], 128, 128, 8
    $region9: #{fwd.1} parent=1 // pred_fallthru
      _
    // Predicated region
    $region10: #{fwd.1} parent=1 // pred_check
      _
    $region11: #{fwd.1} parent=1 // pred_check_branch
      %23 = sbr.rel (0) target = $region13
    $region12: #{fwd.1} parent=1 // pred_region
      %24 = dma.done [#allocation3], 9728
    $region13: #{fwd.1} parent=1 // pred_fallthru
      _
    %v25 = vld [vmem:[%s0] sm:$0xff]
    %v26 = vld [vmem:[%s0 + $0x8] sm:$0x1]
    %v27 = vld [vmem:[#allocation2] sm:$0xff]
    %v28 = vld [vmem:[#allocation2 + $0x8] sm:$0x1]
    %v29 = vld [vmem:[#allocation2 + $0x10] sm:$0xff]
    %v30 = vld [vmem:[#allocation2 + $0x18] sm:$0x1]
    %vm31 = vcmask 1040384
    %v32 = vsel %vm31, %v26, 0.0
    %v33 = vadd.f32 %v25, %v32
    %v34 = vrot.slane %v33, 4
    %v35 = vadd.f32 %v33, %v34
    %v36 = vrot.slane %v35, 2
    %v37 = vadd.f32 %v35, %v36
    %v38 = vrot.slane %v37, 1
    %v39 = vadd.f32 %v37, %v38
    %v40 = vmul.f32 %v39, 0.11111111
    %v41 = vmul.f32 %v25, %v25
    %v42 = vmul.f32 %v26, %v26
    %v43 = vsel %vm31, %v42, 0.0
    %v44 = vadd.f32 %v41, %v43
    %v45 = vrot.slane %v44, 4
    %v46 = vadd.f32 %v44, %v45
    %v47 = vrot.slane %v46, 2
    %v48 = vadd.f32 %v46, %v47
    %v49 = vrot.slane %v48, 1
    %v50 = vadd.f32 %v48, %v49
    %v51 = vmul.f32 %v50, 0.11111111
    %v52 = vmul.f32 %v40, %v40
    %v53 = vsub.f32 %v51, %v52
    %v54 = vmax.f32 %v53, 0.0
    %v55 = vsub.f32 %v25, %v40
    %v56 = vsub.f32 %v26, %v40
    %v57 = vadd.f32 %v54, 1e-05
    %v58 = vrsqrt.pop %v57
    %v59 = vmul.f32 %v55, %v58
    %v60 = vmul.f32 %v56, %v58
    %62 = vset.pattern.permute.xlu0 0
    %63 = vperm.xlu0 %62, %v27
    %v64 = vpop.permute.xlu0 %63
    %67 = vset.pattern.permute.xlu0 0
    %68 = vperm.xlu0 %67, %v28
    %v69 = vpop.permute.xlu0 %68
    %v71 = vmul.f32 %v59, %v64
    %v72 = vmul.f32 %v60, %v69
    %74 = vset.pattern.permute.xlu0 0
    %75 = vperm.xlu0 %74, %v29
    %v76 = vpop.permute.xlu0 %75
    %79 = vset.pattern.permute.xlu0 0
    %80 = vperm.xlu0 %79, %v30
    %v81 = vpop.permute.xlu0 %80
    %v83 = vadd.f32 %v71, %v76
    %v84 = vadd.f32 %v72, %v81
    %v85 = vmax.f32 %v83, 0.0
    %v86 = vmax.f32 %v84, 0.0
    %v87 = vld [vmem:[#allocation2 + $0x20] sm:$0xf]
    %v88 = vld [vmem:[#allocation2 + $0x28] sm:$0xf]
    %90 = vset.pattern.permute.xlu0 0
    %91 = vperm.xlu0 %90, %v88
    %v92 = vpop.permute.xlu0 %91
    %vm94 = vcmask 72704
    %v96 = vsel %vm94, %v87, 0
    %v99 = vsel %vm31, %v86, 0
    %101 = vmatprep.subr.mxu0 0.0
    %102 = vmatpush1.msra.mxu0 %v85
    %103 = vmatprep.subr.mxu0 0.0
    %104 = vmatpush1.msra.mxu0 %v99
    %105 = vmatprep.subr.mxu0 0.0
    %106 = vmatpush1.msra.mxu0 0.0
    %107 = vmatprep.subr.mxu0 0.0
    %108 = vmatpush1.msra.mxu0 0.0
    %109 = vmatprep.subr.mxu0 0.0
    %110 = vmatpush1.msra.mxu0 0.0
    %111 = vmatprep.subr.mxu0 0.0
    %112 = vmatpush1.msra.mxu0 0.0
    %113 = vmatprep.subr.mxu0 0.0
    %114 = vmatpush1.msra.mxu0 0.0
    %115 = vmatprep.subr.mxu0 0.0
    %116 = vmatpush1.msra.mxu0 0.0
    %117 = vmatprep.subr.mxu0 0.0
    %118 = vmatpush1.msra.mxu0 0.0
    %119 = vmatprep.subr.mxu0 0.0
    %120 = vmatpush1.msra.mxu0 0.0
    %121 = vmatprep.subr.mxu0 0.0
    %122 = vmatpush1.msra.mxu0 0.0
    %123 = vmatprep.subr.mxu0 0.0
    %124 = vmatpush1.msra.mxu0 0.0
    %125 = vmatprep.subr.mxu0 0.0
    %126 = vmatpush1.msra.mxu0 0.0
    %127 = vmatprep.subr.mxu0 0.0
    %128 = vmatpush1.msra.mxu0 0.0
    %129 = vmatprep.subr.mxu0 0.0
    %130 = vmatpush1.msra.mxu0 0.0
    %131 = vmatprep.subr.mxu0 0.0
    %132 = vmatpush1.msra.mxu0 0.0
    %133 = vmatprep.subr.mxu0 0.0
    %134 = vmatpush1.msra.mxu0 0.0
    %135 = vmatprep.subr.mxu0 0.0
    %136 = vmatpush1.msra.mxu0 0.0
    %137 = vmatprep.subr.mxu0 0.0
    %138 = vmatpush1.msra.mxu0 0.0
    %139 = vmatprep.subr.mxu0 0.0
    %140 = vmatpush1.msra.mxu0 0.0
    %141 = vmatprep.subr.mxu0 0.0
    %142 = vmatpush1.msra.mxu0 0.0
    %143 = vmatprep.subr.mxu0 0.0
    %144 = vmatpush1.msra.mxu0 0.0
    %145 = vmatprep.subr.mxu0 0.0
    %146 = vmatpush1.msra.mxu0 0.0
    %147 = vmatprep.subr.mxu0 0.0
    %148 = vmatpush1.msra.mxu0 0.0
    %149 = vmatprep.subr.mxu0 0.0
    %150 = vmatpush1.msra.mxu0 0.0
    %151 = vmatprep.subr.mxu0 0.0
    %152 = vmatpush1.msra.mxu0 0.0
    %153 = vmatprep.subr.mxu0 0.0
    %154 = vmatpush1.msra.mxu0 0.0
    %155 = vmatprep.subr.mxu0 0.0
    %156 = vmatpush1.msra.mxu0 0.0
    %157 = vmatprep.subr.mxu0 0.0
    %158 = vmatpush1.msra.mxu0 0.0
    %159 = vmatprep.subr.mxu0 0.0
    %160 = vmatpush1.msra.mxu0 0.0
    %161 = vmatprep.subr.mxu0 0.0
    %162 = vmatpush1.msra.mxu0 0.0
    %163 = vmatprep.subr.mxu0 0.0
    %164 = vmatpush1.msra.mxu0 0.0
    %165 = vmatprep.mubr.f32.mxu0 0.0
    %166 = vmatmul.mubr.f32.gmra.mrb[0].mxu0 %v96
    %v167 = vpop.f32.mrb[0].mxu0
    %v168 = vadd.f32 %v92, %v167
    %v169 = vpop.f32.mrb[0].mxu0
    %170 = vdwg.mxu0
    %v171 = vmax.f32 %v168, 0.0
    %v173 = vrot.slane %v171, 7
    %v175 = vsel %vm31, %v26, %v173
    %v176 = vld [vmem:[#allocation2 + $0x30] sm:$0xff]
    %v177 = vld [vmem:[#allocation2 + $0x38] sm:$0x1f]
    %v178 = vld [vmem:[#allocation2 + $0x40] sm:$0xff]
    %v179 = vld [vmem:[#allocation2 + $0x48] sm:$0x1f]
    %vm180 = vcmask 1044480
    %v181 = vsel %vm180, %v175, 0.0
    %v182 = vadd.f32 %v25, %v181
    %v183 = vrot.slane %v182, 4
    %v184 = vadd.f32 %v182, %v183
    %v185 = vrot.slane %v184, 2
    %v186 = vadd.f32 %v184, %v185
    %v187 = vrot.slane %v186, 1
    %v188 = vadd.f32 %v186, %v187
    %v189 = vmul.f32 %v188, 0.07692308
    %v190 = vmul.f32 %v175, %v175
    %v191 = vsel %vm180, %v190, 0.0
    %v192 = vadd.f32 %v41, %v191
    %v193 = vrot.slane %v192, 4
    %v194 = vadd.f32 %v192, %v193
    %v195 = vrot.slane %v194, 2
    %v196 = vadd.f32 %v194, %v195
    %v197 = vrot.slane %v196, 1
    %v198 = vadd.f32 %v196, %v197
    %v199 = vmul.f32 %v198, 0.07692308
    %v200 = vmul.f32 %v189, %v189
    %v201 = vsub.f32 %v199, %v200
    %v202 = vmax.f32 %v201, 0.0
    %v203 = vsub.f32 %v25, %v189
    %v204 = vsub.f32 %v175, %v189
    %v205 = vadd.f32 %v202, 1e-05
    %v206 = vrsqrt.pop %v205
    %v207 = vmul.f32 %v203, %v206
    %v208 = vmul.f32 %v204, %v206
    %210 = vset.pattern.permute.xlu0 0
    %211 = vperm.xlu0 %210, %v176
    %v212 = vpop.permute.xlu0 %211
    %215 = vset.pattern.permute.xlu0 0
    %216 = vperm.xlu0 %215, %v177
    %v217 = vpop.permute.xlu0 %216
    %v219 = vmul.f32 %v207, %v212
    %v220 = vmul.f32 %v208, %v217
    %222 = vset.pattern.permute.xlu0 0
    %223 = vperm.xlu0 %222, %v178
    %v224 = vpop.permute.xlu0 %223
    %227 = vset.pattern.permute.xlu0 0
    %228 = vperm.xlu0 %227, %v179
    %v229 = vpop.permute.xlu0 %228
    %v231 = vadd.f32 %v219, %v224
    %v232 = vadd.f32 %v220, %v229
    %v233 = vmax.f32 %v231, 0.0
    %v234 = vmax.f32 %v232, 0.0
    %v235 = vld [vmem:[#allocation2 + $0x50] sm:$0xf]
    %v236 = vld [vmem:[#allocation2 + $0x58] sm:$0xf]
    %238 = vset.pattern.permute.xlu0 0
    %239 = vperm.xlu0 %238, %v236
    %v240 = vpop.permute.xlu0 %239
    %vm242 = vcmask 105472
    %v244 = vsel %vm242, %v235, 0
    %v247 = vsel %vm180, %v234, 0
    %249 = vmatprep.subr.mxu0 0.0
    %250 = vmatpush1.msra.mxu0 %v233
    %251 = vmatprep.subr.mxu0 0.0
    %252 = vmatpush1.msra.mxu0 %v247
    %253 = vmatprep.subr.mxu0 0.0
    %254 = vmatpush1.msra.mxu0 0.0
    %255 = vmatprep.subr.mxu0 0.0
    %256 = vmatpush1.msra.mxu0 0.0
    %257 = vmatprep.subr.mxu0 0.0
    %258 = vmatpush1.msra.mxu0 0.0
    %259 = vmatprep.subr.mxu0 0.0
    %260 = vmatpush1.msra.mxu0 0.0
    %261 = vmatprep.subr.mxu0 0.0
    %262 = vmatpush1.msra.mxu0 0.0
    %263 = vmatprep.subr.mxu0 0.0
    %264 = vmatpush1.msra.mxu0 0.0
    %265 = vmatprep.subr.mxu0 0.0
    %266 = vmatpush1.msra.mxu0 0.0
    %267 = vmatprep.subr.mxu0 0.0
    %268 = vmatpush1.msra.mxu0 0.0
    %269 = vmatprep.subr.mxu0 0.0
    %270 = vmatpush1.msra.mxu0 0.0
    %271 = vmatprep.subr.mxu0 0.0
    %272 = vmatpush1.msra.mxu0 0.0
    %273 = vmatprep.subr.mxu0 0.0
    %274 = vmatpush1.msra.mxu0 0.0
    %275 = vmatprep.subr.mxu0 0.0
    %276 = vmatpush1.msra.mxu0 0.0
    %277 = vmatprep.subr.mxu0 0.0
    %278 = vmatpush1.msra.mxu0 0.0
    %279 = vmatprep.subr.mxu0 0.0
    %280 = vmatpush1.msra.mxu0 0.0
    %281 = vmatprep.subr.mxu0 0.0
    %282 = vmatpush1.msra.mxu0 0.0
    %283 = vmatprep.subr.mxu0 0.0
    %284 = vmatpush1.msra.mxu0 0.0
    %285 = vmatprep.subr.mxu0 0.0
    %286 = vmatpush1.msra.mxu0 0.0
    %287 = vmatprep.subr.mxu0 0.0
    %288 = vmatpush1.msra.mxu0 0.0
    %289 = vmatprep.subr.mxu0 0.0
    %290 = vmatpush1.msra.mxu0 0.0
    %291 = vmatprep.subr.mxu0 0.0
    %292 = vmatpush1.msra.mxu0 0.0
    %293 = vmatprep.subr.mxu0 0.0
    %294 = vmatpush1.msra.mxu0 0.0
    %295 = vmatprep.subr.mxu0 0.0
    %296 = vmatpush1.msra.mxu0 0.0
    %297 = vmatprep.subr.mxu0 0.0
    %298 = vmatpush1.msra.mxu0 0.0
    %299 = vmatprep.subr.mxu0 0.0
    %300 = vmatpush1.msra.mxu0 0.0
    %301 = vmatprep.subr.mxu0 0.0
    %302 = vmatpush1.msra.mxu0 0.0
    %303 = vmatprep.subr.mxu0 0.0
    %304 = vmatpush1.msra.mxu0 0.0
    %305 = vmatprep.subr.mxu0 0.0
    %306 = vmatpush1.msra.mxu0 0.0
    %307 = vmatprep.subr.mxu0 0.0
    %308 = vmatpush1.msra.mxu0 0.0
    %309 = vmatprep.subr.mxu0 0.0
    %310 = vmatpush1.msra.mxu0 0.0
    %311 = vmatprep.subr.mxu0 0.0
    %312 = vmatpush1.msra.mxu0 0.0
    %313 = vmatprep.mubr.f32.mxu0 0.0
    %314 = vmatmul.mubr.f32.gmra.mrb[0].mxu0 %v244
    %v315 = vpop.f32.mrb[0].mxu0
    %v316 = vadd.f32 %v240, %v315
    %v317 = vpop.f32.mrb[0].mxu0
    %318 = vdwg.mxu0
    %v319 = vmax.f32 %v316, 0.0
    %v321 = vrot.slane %v319, 3
    %v323 = vsel %vm180, %v175, %v321
    %v324 = vld [vmem:[#allocation2 + $0x60] sm:$0xff]
    %v325 = vld [vmem:[#allocation2 + $0x68] sm:$0xff]
    %v326 = vld [vmem:[#allocation2 + $0x70] sm:$0x1]
    %v327 = vld [vmem:[#allocation2 + $0x78] sm:$0xff]
    %v328 = vld [vmem:[#allocation2 + $0x80] sm:$0xff]
    %v329 = vld [vmem:[#allocation2 + $0x88] sm:$0x1]
    %331 = vset.pattern.permute.xlu0 0
    %332 = vperm.xlu0 %331, %v327
    %v333 = vpop.permute.xlu0 %332
    %336 = vset.pattern.permute.xlu0 0
    %337 = vperm.xlu0 %336, %v328
    %v338 = vpop.permute.xlu0 %337
    %341 = vset.pattern.permute.xlu0 0
    %342 = vperm.xlu0 %341, %v329
    %v343 = vpop.permute.xlu0 %342
    %vm345 = vcmask 138240
    %v347 = vsel %vm345, %v324, 0
    %v350 = vsel %vm345, %v325, 0
    %v353 = vsel %vm345, %v326, 0
    %v355 = vsel %vm31, %v321, 0
    %357 = vmatprep.subr.mxu0 0.0
    %358 = vmatpush1.msra.mxu0 %v25
    %359 = vmatprep.subr.mxu0 0.0
    %360 = vmatpush1.msra.mxu0 %v323
    %361 = vmatprep.subr.mxu0 0.0
    %362 = vmatpush1.msra.mxu0 %v355
    %363 = vmatprep.subr.mxu0 0.0
    %364 = vmatpush1.msra.mxu0 0.0
    %365 = vmatprep.subr.mxu0 0.0
    %366 = vmatpush1.msra.mxu0 0.0
    %367 = vmatprep.subr.mxu0 0.0
    %368 = vmatpush1.msra.mxu0 0.0
    %369 = vmatprep.subr.mxu0 0.0
    %370 = vmatpush1.msra.mxu0 0.0
    %371 = vmatprep.subr.mxu0 0.0
    %372 = vmatpush1.msra.mxu0 0.0
    %373 = vmatprep.subr.mxu0 0.0
    %374 = vmatpush1.msra.mxu0 0.0
    %375 = vmatprep.subr.mxu0 0.0
    %376 = vmatpush1.msra.mxu0 0.0
    %377 = vmatprep.subr.mxu0 0.0
    %378 = vmatpush1.msra.mxu0 0.0
    %379 = vmatprep.subr.mxu0 0.0
    %380 = vmatpush1.msra.mxu0 0.0
    %381 = vmatprep.subr.mxu0 0.0
    %382 = vmatpush1.msra.mxu0 0.0
    %383 = vmatprep.subr.mxu0 0.0
    %384 = vmatpush1.msra.mxu0 0.0
    %385 = vmatprep.subr.mxu0 0.0
    %386 = vmatpush1.msra.mxu0 0.0
    %387 = vmatprep.subr.mxu0 0.0
    %388 = vmatpush1.msra.mxu0 0.0
    %389 = vmatprep.subr.mxu0 0.0
    %390 = vmatpush1.msra.mxu0 0.0
    %391 = vmatprep.subr.mxu0 0.0
    %392 = vmatpush1.msra.mxu0 0.0
    %393 = vmatprep.subr.mxu0 0.0
    %394 = vmatpush1.msra.mxu0 0.0
    %395 = vmatprep.subr.mxu0 0.0
    %396 = vmatpush1.msra.mxu0 0.0
    %397 = vmatprep.subr.mxu0 0.0
    %398 = vmatpush1.msra.mxu0 0.0
    %399 = vmatprep.subr.mxu0 0.0
    %400 = vmatpush1.msra.mxu0 0.0
    %401 = vmatprep.subr.mxu0 0.0
    %402 = vmatpush1.msra.mxu0 0.0
    %403 = vmatprep.subr.mxu0 0.0
    %404 = vmatpush1.msra.mxu0 0.0
    %405 = vmatprep.subr.mxu0 0.0
    %406 = vmatpush1.msra.mxu0 0.0
    %407 = vmatprep.subr.mxu0 0.0
    %408 = vmatpush1.msra.mxu0 0.0
    %409 = vmatprep.subr.mxu0 0.0
    %410 = vmatpush1.msra.mxu0 0.0
    %411 = vmatprep.subr.mxu0 0.0
    %412 = vmatpush1.msra.mxu0 0.0
    %413 = vmatprep.subr.mxu0 0.0
    %414 = vmatpush1.msra.mxu0 0.0
    %415 = vmatprep.subr.mxu0 0.0
    %416 = vmatpush1.msra.mxu0 0.0
    %417 = vmatprep.subr.mxu0 0.0
    %418 = vmatpush1.msra.mxu0 0.0
    %419 = vmatprep.subr.mxu0 0.0
    %420 = vmatpush1.msra.mxu0 0.0
    %421 = vmatprep.mubr.f32.mxu0 0.0
    %422 = vmatmul.mubr.f32.gmra.mrb[0].mxu0 %v347
    %v423 = vpop.f32.mrb[0].mxu0
    %v424 = vadd.f32 %v333, %v423
    %v425 = vpop.f32.mrb[0].mxu0
    %426 = vmatprep.mubr.f32.mxu0 0.0
    %427 = vmatmul.mubr.f32.gmra.mrb[0].mxu0 %v350
    %v428 = vpop.f32.mrb[0].mxu0
    %v429 = vadd.f32 %v338, %v428
    %v430 = vpop.f32.mrb[0].mxu0
    %431 = vmatprep.mubr.f32.mxu0 0.0
    %432 = vmatmul.mubr.f32.gmra.mrb[0].mxu0 %v353
    %v433 = vpop.f32.mrb[0].mxu0
    %v434 = vadd.f32 %v343, %v433
    %v435 = vpop.f32.mrb[0].mxu0
    %436 = vdwg.mxu0
    %v437 = vmax.f32 %v424, 0.0
    %v438 = vmax.f32 %v429, 0.0
    %v439 = vmax.f32 %v434, 0.0
    %v440 = vld [vmem:[#allocation2 + $0x90] sm:$0xff]
    %v441 = vld [vmem:[#allocation2 + $0x98] sm:$0xff]
    %v442 = vld [vmem:[#allocation2 + $0xa0] sm:$0x1]
    %v443 = vld [vmem:[#allocation2 + $0xa8] sm:$0xff]
    %v444 = vld [vmem:[#allocation2 + $0xb0] sm:$0xff]
    %v445 = vld [vmem:[#allocation2 + $0xb8] sm:$0x1]
    %v446 = vadd.f32 %v437, %v438
    %v447 = vsel %vm31, %v439, 0.0
    %v448 = vadd.f32 %v446, %v447
    %v449 = vrot.slane %v448, 4
    %v450 = vadd.f32 %v448, %v449
    %v451 = vrot.slane %v450, 2
    %v452 = vadd.f32 %v450, %v451
    %v453 = vrot.slane %v452, 1
    %v454 = vadd.f32 %v452, %v453
    %v455 = vmul.f32 %v454, 0.05882353
    %v456 = vmul.f32 %v437, %v437
    %v457 = vmul.f32 %v438, %v438
    %v458 = vmul.f32 %v439, %v439
    %v459 = vadd.f32 %v456, %v457
    %v460 = vsel %vm31, %v458, 0.0
    %v461 = vadd.f32 %v459, %v460
    %v462 = vrot.slane %v461, 4
    %v463 = vadd.f32 %v461, %v462
    %v464 = vrot.slane %v463, 2
    %v465 = vadd.f32 %v463, %v464
    %v466 = vrot.slane %v465, 1
    %v467 = vadd.f32 %v465, %v466
    %v468 = vmul.f32 %v467, 0.05882353
    %v469 = vmul.f32 %v455, %v455
    %v470 = vsub.f32 %v468, %v469
    %v471 = vmax.f32 %v470, 0.0
    %v472 = vsub.f32 %v437, %v455
    %v473 = vsub.f32 %v438, %v455
    %v474 = vsub.f32 %v439, %v455
    %v475 = vadd.f32 %v471, 1e-05
    %v476 = vrsqrt.pop %v475
    %v477 = vmul.f32 %v472, %v476
    %v478 = vmul.f32 %v473, %v476
    %v479 = vmul.f32 %v474, %v476
    %481 = vset.pattern.permute.xlu0 0
    %482 = vperm.xlu0 %481, %v440
    %v483 = vpop.permute.xlu0 %482
    %486 = vset.pattern.permute.xlu0 0
    %487 = vperm.xlu0 %486, %v441
    %v488 = vpop.permute.xlu0 %487
    %491 = vset.pattern.permute.xlu0 0
    %492 = vperm.xlu0 %491, %v442
    %v493 = vpop.permute.xlu0 %492
    %v495 = vmul.f32 %v477, %v483
    %v496 = vmul.f32 %v478, %v488
    %v497 = vmul.f32 %v479, %v493
    %499 = vset.pattern.permute.xlu0 0
    %500 = vperm.xlu0 %499, %v443
    %v501 = vpop.permute.xlu0 %500
    %504 = vset.pattern.permute.xlu0 0
    %505 = vperm.xlu0 %504, %v444
    %v506 = vpop.permute.xlu0 %505
    %509 = vset.pattern.permute.xlu0 0
    %510 = vperm.xlu0 %509, %v445
    %v511 = vpop.permute.xlu0 %510
    %v513 = vadd.f32 %v495, %v501
    %v514 = vadd.f32 %v496, %v506
    %v515 = vadd.f32 %v497, %v511
    %v516 = vld [vmem:[#allocation2 + $0xc0] sm:$0xff]
    %v517 = vld [vmem:[#allocation2 + $0xc8] sm:$0xff]
    %v518 = vld [vmem:[#allocation2 + $0xd0] sm:$0x1]
    %v519 = vld [vmem:[#allocation2 + $0xd8] sm:$0xff]
    %v520 = vld [vmem:[#allocation2 + $0xe0] sm:$0xff]
    %v521 = vld [vmem:[#allocation2 + $0xe8] sm:$0x1]
    %523 = vset.pattern.permute.xlu0 0
    %524 = vperm.xlu0 %523, %v519
    %v525 = vpop.permute.xlu0 %524
    %528 = vset.pattern.permute.xlu0 0
    %529 = vperm.xlu0 %528, %v520
    %v530 = vpop.permute.xlu0 %529
    %533 = vset.pattern.permute.xlu0 0
    %534 = vperm.xlu0 %533, %v521
    %v535 = vpop.permute.xlu0 %534
    %v538 = vsel %vm345, %v516, 0
    %v541 = vsel %vm345, %v517, 0
    %v544 = vsel %vm345, %v518, 0
    %v547 = vsel %vm31, %v515, 0
    %549 = vmatprep.subr.mxu0 0.0
    %550 = vmatpush1.msra.mxu0 %v513
    %551 = vmatprep.subr.mxu0 0.0
    %552 = vmatpush1.msra.mxu0 %v514
    %553 = vmatprep.subr.mxu0 0.0
    %554 = vmatpush1.msra.mxu0 %v547
    %555 = vmatprep.subr.mxu0 0.0
    %556 = vmatpush1.msra.mxu0 0.0
    %557 = vmatprep.subr.mxu0 0.0
    %558 = vmatpush1.msra.mxu0 0.0
    %559 = vmatprep.subr.mxu0 0.0
    %560 = vmatpush1.msra.mxu0 0.0
    %561 = vmatprep.subr.mxu0 0.0
    %562 = vmatpush1.msra.mxu0 0.0
    %563 = vmatprep.subr.mxu0 0.0
    %564 = vmatpush1.msra.mxu0 0.0
    %565 = vmatprep.subr.mxu0 0.0
    %566 = vmatpush1.msra.mxu0 0.0
    %567 = vmatprep.subr.mxu0 0.0
    %568 = vmatpush1.msra.mxu0 0.0
    %569 = vmatprep.subr.mxu0 0.0
    %570 = vmatpush1.msra.mxu0 0.0
    %571 = vmatprep.subr.mxu0 0.0
    %572 = vmatpush1.msra.mxu0 0.0
    %573 = vmatprep.subr.mxu0 0.0
    %574 = vmatpush1.msra.mxu0 0.0
    %575 = vmatprep.subr.mxu0 0.0
    %576 = vmatpush1.msra.mxu0 0.0
    %577 = vmatprep.subr.mxu0 0.0
    %578 = vmatpush1.msra.mxu0 0.0
    %579 = vmatprep.subr.mxu0 0.0
    %580 = vmatpush1.msra.mxu0 0.0
    %581 = vmatprep.subr.mxu0 0.0
    %582 = vmatpush1.msra.mxu0 0.0
    %583 = vmatprep.subr.mxu0 0.0
    %584 = vmatpush1.msra.mxu0 0.0
    %585 = vmatprep.subr.mxu0 0.0
    %586 = vmatpush1.msra.mxu0 0.0
    %587 = vmatprep.subr.mxu0 0.0
    %588 = vmatpush1.msra.mxu0 0.0
    %589 = vmatprep.subr.mxu0 0.0
    %590 = vmatpush1.msra.mxu0 0.0
    %591 = vmatprep.subr.mxu0 0.0
    %592 = vmatpush1.msra.mxu0 0.0
    %593 = vmatprep.subr.mxu0 0.0
    %594 = vmatpush1.msra.mxu0 0.0
    %595 = vmatprep.subr.mxu0 0.0
    %596 = vmatpush1.msra.mxu0 0.0
    %597 = vmatprep.subr.mxu0 0.0
    %598 = vmatpush1.msra.mxu0 0.0
    %599 = vmatprep.subr.mxu0 0.0
    %600 = vmatpush1.msra.mxu0 0.0
    %601 = vmatprep.subr.mxu0 0.0
    %602 = vmatpush1.msra.mxu0 0.0
    %603 = vmatprep.subr.mxu0 0.0
    %604 = vmatpush1.msra.mxu0 0.0
    %605 = vmatprep.subr.mxu0 0.0
    %606 = vmatpush1.msra.mxu0 0.0
    %607 = vmatprep.subr.mxu0 0.0
    %608 = vmatpush1.msra.mxu0 0.0
    %609 = vmatprep.subr.mxu0 0.0
    %610 = vmatpush1.msra.mxu0 0.0
    %611 = vmatprep.subr.mxu0 0.0
    %612 = vmatpush1.msra.mxu0 0.0
    %613 = vmatprep.mubr.f32.mxu0 0.0
    %614 = vmatmul.mubr.f32.gmra.mrb[0].mxu0 %v538
    %v615 = vpop.f32.mrb[0].mxu0
    %v616 = vadd.f32 %v525, %v615
    %v617 = vpop.f32.mrb[0].mxu0
    %618 = vmatprep.mubr.f32.mxu0 0.0
    %619 = vmatmul.mubr.f32.gmra.mrb[0].mxu0 %v541
    %v620 = vpop.f32.mrb[0].mxu0
    %v621 = vadd.f32 %v530, %v620
    %v622 = vpop.f32.mrb[0].mxu0
    %623 = vmatprep.mubr.f32.mxu0 0.0
    %624 = vmatmul.mubr.f32.gmra.mrb[0].mxu0 %v544
    %v625 = vpop.f32.mrb[0].mxu0
    %v626 = vadd.f32 %v535, %v625
    %v627 = vpop.f32.mrb[0].mxu0
    %628 = vdwg.mxu0
    %v629 = vmax.f32 %v616, 0.0
    %v630 = vmax.f32 %v621, 0.0
    %v631 = vmax.f32 %v626, 0.0
    %v632 = vld [vmem:[#allocation2 + $0xf0] sm:$0xff]
    %v633 = vld [vmem:[#allocation2 + $0xf8] sm:$0xff]
    %v634 = vld [vmem:[#allocation2 + $0x100] sm:$0x1]
    %v635 = vld [vmem:[#allocation2 + $0x108] sm:$0xff]
    %v636 = vld [vmem:[#allocation2 + $0x110] sm:$0xff]
    %v637 = vld [vmem:[#allocation2 + $0x118] sm:$0x1]
    %v638 = vadd.f32 %v629, %v630
    %v639 = vsel %vm31, %v631, 0.0
    %v640 = vadd.f32 %v638, %v639
    %v641 = vrot.slane %v640, 4
    %v642 = vadd.f32 %v640, %v641
    %v643 = vrot.slane %v642, 2
    %v644 = vadd.f32 %v642, %v643
    %v645 = vrot.slane %v644, 1
    %v646 = vadd.f32 %v644, %v645
    %v647 = vmul.f32 %v646, 0.05882353
    %v648 = vmul.f32 %v629, %v629
    %v649 = vmul.f32 %v630, %v630
    %v650 = vmul.f32 %v631, %v631
    %v651 = vadd.f32 %v648, %v649
    %v652 = vsel %vm31, %v650, 0.0
    %v653 = vadd.f32 %v651, %v652
    %v654 = vrot.slane %v653, 4
    %v655 = vadd.f32 %v653, %v654
    %v656 = vrot.slane %v655, 2
    %v657 = vadd.f32 %v655, %v656
    %v658 = vrot.slane %v657, 1
    %v659 = vadd.f32 %v657, %v658
    %v660 = vmul.f32 %v659, 0.05882353
    %v661 = vmul.f32 %v647, %v647
    %v662 = vsub.f32 %v660, %v661
    %v663 = vmax.f32 %v662, 0.0
    %v664 = vsub.f32 %v629, %v647
    %v665 = vsub.f32 %v630, %v647
    %v666 = vsub.f32 %v631, %v647
    %v667 = vadd.f32 %v663, 1e-05
    %v668 = vrsqrt.pop %v667
    %v669 = vmul.f32 %v664, %v668
    %v670 = vmul.f32 %v665, %v668
    %v671 = vmul.f32 %v666, %v668
    %673 = vset.pattern.permute.xlu0 0
    %674 = vperm.xlu0 %673, %v632
    %v675 = vpop.permute.xlu0 %674
    %678 = vset.pattern.permute.xlu0 0
    %679 = vperm.xlu0 %678, %v633
    %v680 = vpop.permute.xlu0 %679
    %683 = vset.pattern.permute.xlu0 0
    %684 = vperm.xlu0 %683, %v634
    %v685 = vpop.permute.xlu0 %684
    %v687 = vmul.f32 %v669, %v675
    %v688 = vmul.f32 %v670, %v680
    %v689 = vmul.f32 %v671, %v685
    %691 = vset.pattern.permute.xlu0 0
    %692 = vperm.xlu0 %691, %v635
    %v693 = vpop.permute.xlu0 %692
    %696 = vset.pattern.permute.xlu0 0
    %697 = vperm.xlu0 %696, %v636
    %v698 = vpop.permute.xlu0 %697
    %701 = vset.pattern.permute.xlu0 0
    %702 = vperm.xlu0 %701, %v637
    %v703 = vpop.permute.xlu0 %702
    %v705 = vadd.f32 %v687, %v693
    %v706 = vadd.f32 %v688, %v698
    %v707 = vadd.f32 %v689, %v703
    %v708 = vld [vmem:[#allocation2 + $0x120] sm:$0xff]
    %v709 = vld [vmem:[#allocation2 + $0x128] sm:$0xff]
    %v710 = vld [vmem:[#allocation2 + $0x130] sm:$0x1]
    %v711 = vld [vmem:[#allocation2 + $0x138] sm:$0xff]
    %v712 = vld [vmem:[#allocation2 + $0x140] sm:$0xff]
    %v713 = vld [vmem:[#allocation2 + $0x148] sm:$0x1]
    %715 = vset.pattern.permute.xlu0 0
    %716 = vperm.xlu0 %715, %v711
    %v717 = vpop.permute.xlu0 %716
    %720 = vset.pattern.permute.xlu0 0
    %721 = vperm.xlu0 %720, %v712
    %v722 = vpop.permute.xlu0 %721
    %725 = vset.pattern.permute.xlu0 0
    %726 = vperm.xlu0 %725, %v713
    %v727 = vpop.permute.xlu0 %726
    %v730 = vsel %vm345, %v708, 0
    %v733 = vsel %vm345, %v709, 0
    %v736 = vsel %vm345, %v710, 0
    %v739 = vsel %vm31, %v707, 0
    %741 = vmatprep.subr.mxu0 0.0
    %742 = vmatpush1.msra.mxu0 %v705
    %743 = vmatprep.subr.mxu0 0.0
    %744 = vmatpush1.msra.mxu0 %v706
    %745 = vmatprep.subr.mxu0 0.0
    %746 = vmatpush1.msra.mxu0 %v739
    %747 = vmatprep.subr.mxu0 0.0
    %748 = vmatpush1.msra.mxu0 0.0
    %749 = vmatprep.subr.mxu0 0.0
    %750 = vmatpush1.msra.mxu0 0.0
    %751 = vmatprep.subr.mxu0 0.0
    %752 = vmatpush1.msra.mxu0 0.0
    %753 = vmatprep.subr.mxu0 0.0
    %754 = vmatpush1.msra.mxu0 0.0
    %755 = vmatprep.subr.mxu0 0.0
    %756 = vmatpush1.msra.mxu0 0.0
    %757 = vmatprep.subr.mxu0 0.0
    %758 = vmatpush1.msra.mxu0 0.0
    %759 = vmatprep.subr.mxu0 0.0
    %760 = vmatpush1.msra.mxu0 0.0
    %761 = vmatprep.subr.mxu0 0.0
    %762 = vmatpush1.msra.mxu0 0.0
    %763 = vmatprep.subr.mxu0 0.0
    %764 = vmatpush1.msra.mxu0 0.0
    %765 = vmatprep.subr.mxu0 0.0
    %766 = vmatpush1.msra.mxu0 0.0
    %767 = vmatprep.subr.mxu0 0.0
    %768 = vmatpush1.msra.mxu0 0.0
    %769 = vmatprep.subr.mxu0 0.0
    %770 = vmatpush1.msra.mxu0 0.0
    %771 = vmatprep.subr.mxu0 0.0
    %772 = vmatpush1.msra.mxu0 0.0
    %773 = vmatprep.subr.mxu0 0.0
    %774 = vmatpush1.msra.mxu0 0.0
    %775 = vmatprep.subr.mxu0 0.0
    %776 = vmatpush1.msra.mxu0 0.0
    %777 = vmatprep.subr.mxu0 0.0
    %778 = vmatpush1.msra.mxu0 0.0
    %779 = vmatprep.subr.mxu0 0.0
    %780 = vmatpush1.msra.mxu0 0.0
    %781 = vmatprep.subr.mxu0 0.0
    %782 = vmatpush1.msra.mxu0 0.0
    %783 = vmatprep.subr.mxu0 0.0
    %784 = vmatpush1.msra.mxu0 0.0
    %785 = vmatprep.subr.mxu0 0.0
    %786 = vmatpush1.msra.mxu0 0.0
    %787 = vmatprep.subr.mxu0 0.0
    %788 = vmatpush1.msra.mxu0 0.0
    %789 = vmatprep.subr.mxu0 0.0
    %790 = vmatpush1.msra.mxu0 0.0
    %791 = vmatprep.subr.mxu0 0.0
    %792 = vmatpush1.msra.mxu0 0.0
    %793 = vmatprep.subr.mxu0 0.0
    %794 = vmatpush1.msra.mxu0 0.0
    %795 = vmatprep.subr.mxu0 0.0
    %796 = vmatpush1.msra.mxu0 0.0
    %797 = vmatprep.subr.mxu0 0.0
    %798 = vmatpush1.msra.mxu0 0.0
    %799 = vmatprep.subr.mxu0 0.0
    %800 = vmatpush1.msra.mxu0 0.0
    %801 = vmatprep.subr.mxu0 0.0
    %802 = vmatpush1.msra.mxu0 0.0
    %803 = vmatprep.subr.mxu0 0.0
    %804 = vmatpush1.msra.mxu0 0.0
    %805 = vmatprep.mubr.f32.mxu0 0.0
    %806 = vmatmul.mubr.f32.gmra.mrb[0].mxu0 %v730
    %v807 = vpop.f32.mrb[0].mxu0
    %v808 = vadd.f32 %v717, %v807
    %v809 = vpop.f32.mrb[0].mxu0
    %810 = vmatprep.mubr.f32.mxu0 0.0
    %811 = vmatmul.mubr.f32.gmra.mrb[0].mxu0 %v733
    %v812 = vpop.f32.mrb[0].mxu0
    %v813 = vadd.f32 %v722, %v812
    %v814 = vpop.f32.mrb[0].mxu0
    %815 = vmatprep.mubr.f32.mxu0 0.0
    %816 = vmatmul.mubr.f32.gmra.mrb[0].mxu0 %v736
    %v817 = vpop.f32.mrb[0].mxu0
    %v818 = vadd.f32 %v727, %v817
    %v819 = vpop.f32.mrb[0].mxu0
    %820 = vdwg.mxu0
    %v821 = vmax.f32 %v808, 0.0
    %v822 = vmax.f32 %v813, 0.0
    %v823 = vmax.f32 %v818, 0.0
    %v824 = vld [vmem:[#allocation2 + $0x150] sm:$0xff]
    %v825 = vld [vmem:[#allocation2 + $0x158] sm:$0xff]
    %v826 = vld [vmem:[#allocation2 + $0x160] sm:$0x1]
    %v827 = vld [vmem:[#allocation2 + $0x168] sm:$0xff]
    %v828 = vld [vmem:[#allocation2 + $0x170] sm:$0xff]
    %v829 = vld [vmem:[#allocation2 + $0x178] sm:$0x1]
    %v830 = vadd.f32 %v821, %v822
    %v831 = vsel %vm31, %v823, 0.0
    %v832 = vadd.f32 %v830, %v831
    %v833 = vrot.slane %v832, 4
    %v834 = vadd.f32 %v832, %v833
    %v835 = vrot.slane %v834, 2
    %v836 = vadd.f32 %v834, %v835
    %v837 = vrot.slane %v836, 1
    %v838 = vadd.f32 %v836, %v837
    %v839 = vmul.f32 %v838, 0.05882353
    %v840 = vmul.f32 %v821, %v821
    %v841 = vmul.f32 %v822, %v822
    %v842 = vmul.f32 %v823, %v823
    %v843 = vadd.f32 %v840, %v841
    %v844 = vsel %vm31, %v842, 0.0
    %v845 = vadd.f32 %v843, %v844
    %v846 = vrot.slane %v845, 4
    %v847 = vadd.f32 %v845, %v846
    %v848 = vrot.slane %v847, 2
    %v849 = vadd.f32 %v847, %v848
    %v850 = vrot.slane %v849, 1
    %v851 = vadd.f32 %v849, %v850
    %v852 = vmul.f32 %v851, 0.05882353
    %v853 = vmul.f32 %v839, %v839
    %v854 = vsub.f32 %v852, %v853
    %v855 = vmax.f32 %v854, 0.0
    %v856 = vsub.f32 %v821, %v839
    %v857 = vsub.f32 %v822, %v839
    %v858 = vsub.f32 %v823, %v839
    %v859 = vadd.f32 %v855, 1e-05
    %v860 = vrsqrt.pop %v859
    %v861 = vmul.f32 %v856, %v860
    %v862 = vmul.f32 %v857, %v860
    %v863 = vmul.f32 %v858, %v860
    %865 = vset.pattern.permute.xlu0 0
    %866 = vperm.xlu0 %865, %v824
    %v867 = vpop.permute.xlu0 %866
    %870 = vset.pattern.permute.xlu0 0
    %871 = vperm.xlu0 %870, %v825
    %v872 = vpop.permute.xlu0 %871
    %875 = vset.pattern.permute.xlu0 0
    %876 = vperm.xlu0 %875, %v826
    %v877 = vpop.permute.xlu0 %876
    %v879 = vmul.f32 %v861, %v867
    %v880 = vmul.f32 %v862, %v872
    %v881 = vmul.f32 %v863, %v877
    %883 = vset.pattern.permute.xlu0 0
    %884 = vperm.xlu0 %883, %v827
    %v885 = vpop.permute.xlu0 %884
    %888 = vset.pattern.permute.xlu0 0
    %889 = vperm.xlu0 %888, %v828
    %v890 = vpop.permute.xlu0 %889
    %893 = vset.pattern.permute.xlu0 0
    %894 = vperm.xlu0 %893, %v829
    %v895 = vpop.permute.xlu0 %894
    %v897 = vadd.f32 %v879, %v885
    %v898 = vadd.f32 %v880, %v890
    %v899 = vadd.f32 %v881, %v895
    %v900 = vadd.f32 %v897, %v513
    %v901 = vadd.f32 %v898, %v514
    %v902 = vadd.f32 %v899, %v515
    %v903 = vld [vmem:[#allocation2 + $0x180] sm:$0xff]
    %v904 = vld [vmem:[#allocation2 + $0x188] sm:$0xff]
    %v905 = vld [vmem:[#allocation2 + $0x190] sm:$0x1]
    %v906 = vld [vmem:[#allocation2 + $0x198] sm:$0xff]
    %v907 = vld [vmem:[#allocation2 + $0x1a0] sm:$0xff]
    %v908 = vld [vmem:[#allocation2 + $0x1a8] sm:$0x1]
    %910 = vset.pattern.permute.xlu0 0
    %911 = vperm.xlu0 %910, %v906
    %v912 = vpop.permute.xlu0 %911
    %915 = vset.pattern.permute.xlu0 0
    %916 = vperm.xlu0 %915, %v907
    %v917 = vpop.permute.xlu0 %916
    %920 = vset.pattern.permute.xlu0 0
    %921 = vperm.xlu0 %920, %v908
    %v922 = vpop.permute.xlu0 %921
    %v925 = vsel %vm345, %v903, 0
    %v928 = vsel %vm345, %v904, 0
    %v931 = vsel %vm345, %v905, 0
    %v934 = vsel %vm31, %v902, 0
    %936 = vmatprep.subr.mxu0 0.0
    %937 = vmatpush1.msra.mxu0 %v900
    %938 = vmatprep.subr.mxu0 0.0
    %939 = vmatpush1.msra.mxu0 %v901
    %940 = vmatprep.subr.mxu0 0.0
    %941 = vmatpush1.msra.mxu0 %v934
    %942 = vmatprep.subr.mxu0 0.0
    %943 = vmatpush1.msra.mxu0 0.0
    %944 = vmatprep.subr.mxu0 0.0
    %945 = vmatpush1.msra.mxu0 0.0
    %946 = vmatprep.subr.mxu0 0.0
    %947 = vmatpush1.msra.mxu0 0.0
    %948 = vmatprep.subr.mxu0 0.0
    %949 = vmatpush1.msra.mxu0 0.0
    %950 = vmatprep.subr.mxu0 0.0
    %951 = vmatpush1.msra.mxu0 0.0
    %952 = vmatprep.subr.mxu0 0.0
    %953 = vmatpush1.msra.mxu0 0.0
    %954 = vmatprep.subr.mxu0 0.0
    %955 = vmatpush1.msra.mxu0 0.0
    %956 = vmatprep.subr.mxu0 0.0
    %957 = vmatpush1.msra.mxu0 0.0
    %958 = vmatprep.subr.mxu0 0.0
    %959 = vmatpush1.msra.mxu0 0.0
    %960 = vmatprep.subr.mxu0 0.0
    %961 = vmatpush1.msra.mxu0 0.0
    %962 = vmatprep.subr.mxu0 0.0
    %963 = vmatpush1.msra.mxu0 0.0
    %964 = vmatprep.subr.mxu0 0.0
    %965 = vmatpush1.msra.mxu0 0.0
    %966 = vmatprep.subr.mxu0 0.0
    %967 = vmatpush1.msra.mxu0 0.0
    %968 = vmatprep.subr.mxu0 0.0
    %969 = vmatpush1.msra.mxu0 0.0
    %970 = vmatprep.subr.mxu0 0.0
    %971 = vmatpush1.msra.mxu0 0.0
    %972 = vmatprep.subr.mxu0 0.0
    %973 = vmatpush1.msra.mxu0 0.0
    %974 = vmatprep.subr.mxu0 0.0
    %975 = vmatpush1.msra.mxu0 0.0
    %976 = vmatprep.subr.mxu0 0.0
    %977 = vmatpush1.msra.mxu0 0.0
    %978 = vmatprep.subr.mxu0 0.0
    %979 = vmatpush1.msra.mxu0 0.0
    %980 = vmatprep.subr.mxu0 0.0
    %981 = vmatpush1.msra.mxu0 0.0
    %982 = vmatprep.subr.mxu0 0.0
    %983 = vmatpush1.msra.mxu0 0.0
    %984 = vmatprep.subr.mxu0 0.0
    %985 = vmatpush1.msra.mxu0 0.0
    %986 = vmatprep.subr.mxu0 0.0
    %987 = vmatpush1.msra.mxu0 0.0
    %988 = vmatprep.subr.mxu0 0.0
    %989 = vmatpush1.msra.mxu0 0.0
    %990 = vmatprep.subr.mxu0 0.0
    %991 = vmatpush1.msra.mxu0 0.0
    %992 = vmatprep.subr.mxu0 0.0
    %993 = vmatpush1.msra.mxu0 0.0
    %994 = vmatprep.subr.mxu0 0.0
    %995 = vmatpush1.msra.mxu0 0.0
    %996 = vmatprep.subr.mxu0 0.0
    %997 = vmatpush1.msra.mxu0 0.0
    %998 = vmatprep.subr.mxu0 0.0
    %999 = vmatpush1.msra.mxu0 0.0
    %1000 = vmatprep.mubr.f32.mxu0 0.0
    %1001 = vmatmul.mubr.f32.gmra.mrb[0].mxu0 %v925
    %v1002 = vpop.f32.mrb[0].mxu0
    %v1003 = vadd.f32 %v912, %v1002
    %v1004 = vpop.f32.mrb[0].mxu0
    %1005 = vmatprep.mubr.f32.mxu0 0.0
    %1006 = vmatmul.mubr.f32.gmra.mrb[0].mxu0 %v928
    %v1007 = vpop.f32.mrb[0].mxu0
    %v1008 = vadd.f32 %v917, %v1007
    %v1009 = vpop.f32.mrb[0].mxu0
    %1010 = vmatprep.mubr.f32.mxu0 0.0
    %1011 = vmatmul.mubr.f32.gmra.mrb[0].mxu0 %v931
    %v1012 = vpop.f32.mrb[0].mxu0
    %v1013 = vadd.f32 %v922, %v1012
    %v1014 = vpop.f32.mrb[0].mxu0
    %1015 = vdwg.mxu0
    %v1016 = vmax.f32 %v1003, 0.0
    %v1017 = vmax.f32 %v1008, 0.0
    %v1018 = vmax.f32 %v1013, 0.0
    %v1019 = vld [vmem:[#allocation2 + $0x1b0] sm:$0xff]
    %v1020 = vld [vmem:[#allocation2 + $0x1b8] sm:$0xff]
    %v1021 = vld [vmem:[#allocation2 + $0x1c0] sm:$0x1]
    %v1022 = vld [vmem:[#allocation2 + $0x1c8] sm:$0xff]
    %v1023 = vld [vmem:[#allocation2 + $0x1d0] sm:$0xff]
    %v1024 = vld [vmem:[#allocation2 + $0x1d8] sm:$0x1]
    %v1025 = vadd.f32 %v1016, %v1017
    %v1026 = vsel %vm31, %v1018, 0.0
    %v1027 = vadd.f32 %v1025, %v1026
    %v1028 = vrot.slane %v1027, 4
    %v1029 = vadd.f32 %v1027, %v1028
    %v1030 = vrot.slane %v1029, 2
    %v1031 = vadd.f32 %v1029, %v1030
    %v1032 = vrot.slane %v1031, 1
    %v1033 = vadd.f32 %v1031, %v1032
    %v1034 = vmul.f32 %v1033, 0.05882353
    %v1035 = vmul.f32 %v1016, %v1016
    %v1036 = vmul.f32 %v1017, %v1017
    %v1037 = vmul.f32 %v1018, %v1018
    %v1038 = vadd.f32 %v1035, %v1036
    %v1039 = vsel %vm31, %v1037, 0.0
    %v1040 = vadd.f32 %v1038, %v1039
    %v1041 = vrot.slane %v1040, 4
    %v1042 = vadd.f32 %v1040, %v1041
    %v1043 = vrot.slane %v1042, 2
    %v1044 = vadd.f32 %v1042, %v1043
    %v1045 = vrot.slane %v1044, 1
    %v1046 = vadd.f32 %v1044, %v1045
    %v1047 = vmul.f32 %v1046, 0.05882353
    %v1048 = vmul.f32 %v1034, %v1034
    %v1049 = vsub.f32 %v1047, %v1048
    %v1050 = vmax.f32 %v1049, 0.0
    %v1051 = vsub.f32 %v1016, %v1034
    %v1052 = vsub.f32 %v1017, %v1034
    %v1053 = vsub.f32 %v1018, %v1034
    %v1054 = vadd.f32 %v1050, 1e-05
    %v1055 = vrsqrt.pop %v1054
    %v1056 = vmul.f32 %v1051, %v1055
    %v1057 = vmul.f32 %v1052, %v1055
    %v1058 = vmul.f32 %v1053, %v1055
    %1060 = vset.pattern.permute.xlu0 0
    %1061 = vperm.xlu0 %1060, %v1019
    %v1062 = vpop.permute.xlu0 %1061
    %1065 = vset.pattern.permute.xlu0 0
    %1066 = vperm.xlu0 %1065, %v1020
    %v1067 = vpop.permute.xlu0 %1066
    %1070 = vset.pattern.permute.xlu0 0
    %1071 = vperm.xlu0 %1070, %v1021
    %v1072 = vpop.permute.xlu0 %1071
    %v1074 = vmul.f32 %v1056, %v1062
    %v1075 = vmul.f32 %v1057, %v1067
    %v1076 = vmul.f32 %v1058, %v1072
    %1078 = vset.pattern.permute.xlu0 0
    %1079 = vperm.xlu0 %1078, %v1022
    %v1080 = vpop.permute.xlu0 %1079
    %1083 = vset.pattern.permute.xlu0 0
    %1084 = vperm.xlu0 %1083, %v1023
    %v1085 = vpop.permute.xlu0 %1084
    %1088 = vset.pattern.permute.xlu0 0
    %1089 = vperm.xlu0 %1088, %v1024
    %v1090 = vpop.permute.xlu0 %1089
    %v1092 = vadd.f32 %v1074, %v1080
    %v1093 = vadd.f32 %v1075, %v1085
    %v1094 = vadd.f32 %v1076, %v1090
    %v1095 = vld [vmem:[#allocation2 + $0x1e0] sm:$0xff]
    %v1096 = vld [vmem:[#allocation2 + $0x1e8] sm:$0xff]
    %v1097 = vld [vmem:[#allocation2 + $0x1f0] sm:$0x1]
    %v1098 = vld [vmem:[#allocation2 + $0x1f8] sm:$0xff]
    %v1099 = vld [vmem:[#allocation2 + $0x200] sm:$0xff]
    %v1100 = vld [vmem:[#allocation2 + $0x208] sm:$0x1]
    %1102 = vset.pattern.permute.xlu0 0
    %1103 = vperm.xlu0 %1102, %v1098
    %v1104 = vpop.permute.xlu0 %1103
    %1107 = vset.pattern.permute.xlu0 0
    %1108 = vperm.xlu0 %1107, %v1099
    %v1109 = vpop.permute.xlu0 %1108
    %1112 = vset.pattern.permute.xlu0 0
    %1113 = vperm.xlu0 %1112, %v1100
    %v1114 = vpop.permute.xlu0 %1113
    %v1117 = vsel %vm345, %v1095, 0
    %v1120 = vsel %vm345, %v1096, 0
    %v1123 = vsel %vm345, %v1097, 0
    %v1126 = vsel %vm31, %v1094, 0
    %1128 = vmatprep.subr.mxu0 0.0
    %1129 = vmatpush1.msra.mxu0 %v1092
    %1130 = vmatprep.subr.mxu0 0.0
    %1131 = vmatpush1.msra.mxu0 %v1093
    %1132 = vmatprep.subr.mxu0 0.0
    %1133 = vmatpush1.msra.mxu0 %v1126
    %1134 = vmatprep.subr.mxu0 0.0
    %1135 = vmatpush1.msra.mxu0 0.0
    %1136 = vmatprep.subr.mxu0 0.0
    %1137 = vmatpush1.msra.mxu0 0.0
    %1138 = vmatprep.subr.mxu0 0.0
    %1139 = vmatpush1.msra.mxu0 0.0
    %1140 = vmatprep.subr.mxu0 0.0
    %1141 = vmatpush1.msra.mxu0 0.0
    %1142 = vmatprep.subr.mxu0 0.0
    %1143 = vmatpush1.msra.mxu0 0.0
    %1144 = vmatprep.subr.mxu0 0.0
    %1145 = vmatpush1.msra.mxu0 0.0
    %1146 = vmatprep.subr.mxu0 0.0
    %1147 = vmatpush1.msra.mxu0 0.0
    %1148 = vmatprep.subr.mxu0 0.0
    %1149 = vmatpush1.msra.mxu0 0.0
    %1150 = vmatprep.subr.mxu0 0.0
    %1151 = vmatpush1.msra.mxu0 0.0
    %1152 = vmatprep.subr.mxu0 0.0
    %1153 = vmatpush1.msra.mxu0 0.0
    %1154 = vmatprep.subr.mxu0 0.0
    %1155 = vmatpush1.msra.mxu0 0.0
    %1156 = vmatprep.subr.mxu0 0.0
    %1157 = vmatpush1.msra.mxu0 0.0
    %1158 = vmatprep.subr.mxu0 0.0
    %1159 = vmatpush1.msra.mxu0 0.0
    %1160 = vmatprep.subr.mxu0 0.0
    %1161 = vmatpush1.msra.mxu0 0.0
    %1162 = vmatprep.subr.mxu0 0.0
    %1163 = vmatpush1.msra.mxu0 0.0
    %1164 = vmatprep.subr.mxu0 0.0
    %1165 = vmatpush1.msra.mxu0 0.0
    %1166 = vmatprep.subr.mxu0 0.0
    %1167 = vmatpush1.msra.mxu0 0.0
    %1168 = vmatprep.subr.mxu0 0.0
    %1169 = vmatpush1.msra.mxu0 0.0
    %1170 = vmatprep.subr.mxu0 0.0
    %1171 = vmatpush1.msra.mxu0 0.0
    %1172 = vmatprep.subr.mxu0 0.0
    %1173 = vmatpush1.msra.mxu0 0.0
    %1174 = vmatprep.subr.mxu0 0.0
    %1175 = vmatpush1.msra.mxu0 0.0
    %1176 = vmatprep.subr.mxu0 0.0
    %1177 = vmatpush1.msra.mxu0 0.0
    %1178 = vmatprep.subr.mxu0 0.0
    %1179 = vmatpush1.msra.mxu0 0.0
    %1180 = vmatprep.subr.mxu0 0.0
    %1181 = vmatpush1.msra.mxu0 0.0
    %1182 = vmatprep.subr.mxu0 0.0
    %1183 = vmatpush1.msra.mxu0 0.0
    %1184 = vmatprep.subr.mxu0 0.0
    %1185 = vmatpush1.msra.mxu0 0.0
    %1186 = vmatprep.subr.mxu0 0.0
    %1187 = vmatpush1.msra.mxu0 0.0
    %1188 = vmatprep.subr.mxu0 0.0
    %1189 = vmatpush1.msra.mxu0 0.0
    %1190 = vmatprep.subr.mxu0 0.0
    %1191 = vmatpush1.msra.mxu0 0.0
    %1192 = vmatprep.mubr.f32.mxu0 0.0
    %1193 = vmatmul.mubr.f32.gmra.mrb[0].mxu0 %v1117
    %v1194 = vpop.f32.mrb[0].mxu0
    %v1195 = vadd.f32 %v1104, %v1194
    %v1196 = vpop.f32.mrb[0].mxu0
    %1197 = vmatprep.mubr.f32.mxu0 0.0
    %1198 = vmatmul.mubr.f32.gmra.mrb[0].mxu0 %v1120
    %v1199 = vpop.f32.mrb[0].mxu0
    %v1200 = vadd.f32 %v1109, %v1199
    %v1201 = vpop.f32.mrb[0].mxu0
    %1202 = vmatprep.mubr.f32.mxu0 0.0
    %1203 = vmatmul.mubr.f32.gmra.mrb[0].mxu0 %v1123
    %v1204 = vpop.f32.mrb[0].mxu0
    %v1205 = vadd.f32 %v1114, %v1204
    %v1206 = vpop.f32.mrb[0].mxu0
    %1207 = vdwg.mxu0
    %v1208 = vmax.f32 %v1195, 0.0
    %v1209 = vmax.f32 %v1200, 0.0
    %v1210 = vmax.f32 %v1205, 0.0
    %v1211 = vld [vmem:[#allocation2 + $0x210] sm:$0xff]
    %v1212 = vld [vmem:[#allocation2 + $0x218] sm:$0xff]
    %v1213 = vld [vmem:[#allocation2 + $0x220] sm:$0x1]
    %v1214 = vld [vmem:[#allocation2 + $0x228] sm:$0xff]
    %v1215 = vld [vmem:[#allocation2 + $0x230] sm:$0xff]
    %v1216 = vld [vmem:[#allocation2 + $0x238] sm:$0x1]
    %v1217 = vadd.f32 %v1208, %v1209
    %v1218 = vsel %vm31, %v1210, 0.0
    %v1219 = vadd.f32 %v1217, %v1218
    %v1220 = vrot.slane %v1219, 4
    %v1221 = vadd.f32 %v1219, %v1220
    %v1222 = vrot.slane %v1221, 2
    %v1223 = vadd.f32 %v1221, %v1222
    %v1224 = vrot.slane %v1223, 1
    %v1225 = vadd.f32 %v1223, %v1224
    %v1226 = vmul.f32 %v1225, 0.05882353
    %v1227 = vmul.f32 %v1208, %v1208
    %v1228 = vmul.f32 %v1209, %v1209
    %v1229 = vmul.f32 %v1210, %v1210
    %v1230 = vadd.f32 %v1227, %v1228
    %v1231 = vsel %vm31, %v1229, 0.0
    %v1232 = vadd.f32 %v1230, %v1231
    %v1233 = vrot.slane %v1232, 4
    %v1234 = vadd.f32 %v1232, %v1233
    %v1235 = vrot.slane %v1234, 2
    %v1236 = vadd.f32 %v1234, %v1235
    %v1237 = vrot.slane %v1236, 1
    %v1238 = vadd.f32 %v1236, %v1237
    %v1239 = vmul.f32 %v1238, 0.05882353
    %v1240 = vmul.f32 %v1226, %v1226
    %v1241 = vsub.f32 %v1239, %v1240
    %v1242 = vmax.f32 %v1241, 0.0
    %v1243 = vsub.f32 %v1208, %v1226
    %v1244 = vsub.f32 %v1209, %v1226
    %v1245 = vsub.f32 %v1210, %v1226
    %v1246 = vadd.f32 %v1242, 1e-05
    %v1247 = vrsqrt.pop %v1246
    %v1248 = vmul.f32 %v1243, %v1247
    %v1249 = vmul.f32 %v1244, %v1247
    %v1250 = vmul.f32 %v1245, %v1247
    %1252 = vset.pattern.permute.xlu0 0
    %1253 = vperm.xlu0 %1252, %v1211
    %v1254 = vpop.permute.xlu0 %1253
    %1257 = vset.pattern.permute.xlu0 0
    %1258 = vperm.xlu0 %1257, %v1212
    %v1259 = vpop.permute.xlu0 %1258
    %1262 = vset.pattern.permute.xlu0 0
    %1263 = vperm.xlu0 %1262, %v1213
    %v1264 = vpop.permute.xlu0 %1263
    %v1266 = vmul.f32 %v1248, %v1254
    %v1267 = vmul.f32 %v1249, %v1259
    %v1268 = vmul.f32 %v1250, %v1264
    %1270 = vset.pattern.permute.xlu0 0
    %1271 = vperm.xlu0 %1270, %v1214
    %v1272 = vpop.permute.xlu0 %1271
    %1275 = vset.pattern.permute.xlu0 0
    %1276 = vperm.xlu0 %1275, %v1215
    %v1277 = vpop.permute.xlu0 %1276
    %1280 = vset.pattern.permute.xlu0 0
    %1281 = vperm.xlu0 %1280, %v1216
    %v1282 = vpop.permute.xlu0 %1281
    %v1284 = vadd.f32 %v1266, %v1272
    %v1285 = vadd.f32 %v1267, %v1277
    %v1286 = vadd.f32 %v1268, %v1282
    %v1287 = vadd.f32 %v1284, %v900
    %v1288 = vadd.f32 %v1285, %v901
    %v1289 = vadd.f32 %v1286, %v902
    %v1290 = vld [vmem:[#allocation2 + $0x240] sm:$0x1f]
    %v1291 = vld [vmem:[#allocation2 + $0x248] sm:$0x1f]
    %v1293 = vsel %vm345, %v1291, 0
    %1295 = vmatprep.subr.mxu0 0.0
    %1296 = vmatpush1.msra.mxu0 %v25
    %1297 = vmatprep.subr.mxu0 0.0
    %1298 = vmatpush1.msra.mxu0 %v323
    %1299 = vmatprep.subr.mxu0 0.0
    %1300 = vmatpush1.msra.mxu0 %v355
    %1301 = vmatprep.subr.mxu0 0.0
    %1302 = vmatpush1.msra.mxu0 0.0
    %1303 = vmatprep.subr.mxu0 0.0
    %1304 = vmatpush1.msra.mxu0 0.0
    %1305 = vmatprep.subr.mxu0 0.0
    %1306 = vmatpush1.msra.mxu0 0.0
    %1307 = vmatprep.subr.mxu0 0.0
    %1308 = vmatpush1.msra.mxu0 0.0
    %1309 = vmatprep.subr.mxu0 0.0
    %1310 = vmatpush1.msra.mxu0 0.0
    %1311 = vmatprep.subr.mxu0 0.0
    %1312 = vmatpush1.msra.mxu0 0.0
    %1313 = vmatprep.subr.mxu0 0.0
    %1314 = vmatpush1.msra.mxu0 0.0
    %1315 = vmatprep.subr.mxu0 0.0
    %1316 = vmatpush1.msra.mxu0 0.0
    %1317 = vmatprep.subr.mxu0 0.0
    %1318 = vmatpush1.msra.mxu0 0.0
    %1319 = vmatprep.subr.mxu0 0.0
    %1320 = vmatpush1.msra.mxu0 0.0
    %1321 = vmatprep.subr.mxu0 0.0
    %1322 = vmatpush1.msra.mxu0 0.0
    %1323 = vmatprep.subr.mxu0 0.0
    %1324 = vmatpush1.msra.mxu0 0.0
    %1325 = vmatprep.subr.mxu0 0.0
    %1326 = vmatpush1.msra.mxu0 0.0
    %1327 = vmatprep.subr.mxu0 0.0
    %1328 = vmatpush1.msra.mxu0 0.0
    %1329 = vmatprep.subr.mxu0 0.0
    %1330 = vmatpush1.msra.mxu0 0.0
    %1331 = vmatprep.subr.mxu0 0.0
    %1332 = vmatpush1.msra.mxu0 0.0
    %1333 = vmatprep.subr.mxu0 0.0
    %1334 = vmatpush1.msra.mxu0 0.0
    %1335 = vmatprep.subr.mxu0 0.0
    %1336 = vmatpush1.msra.mxu0 0.0
    %1337 = vmatprep.subr.mxu0 0.0
    %1338 = vmatpush1.msra.mxu0 0.0
    %1339 = vmatprep.subr.mxu0 0.0
    %1340 = vmatpush1.msra.mxu0 0.0
    %1341 = vmatprep.subr.mxu0 0.0
    %1342 = vmatpush1.msra.mxu0 0.0
    %1343 = vmatprep.subr.mxu0 0.0
    %1344 = vmatpush1.msra.mxu0 0.0
    %1345 = vmatprep.subr.mxu0 0.0
    %1346 = vmatpush1.msra.mxu0 0.0
    %1347 = vmatprep.subr.mxu0 0.0
    %1348 = vmatpush1.msra.mxu0 0.0
    %1349 = vmatprep.subr.mxu0 0.0
    %1350 = vmatpush1.msra.mxu0 0.0
    %1351 = vmatprep.subr.mxu0 0.0
    %1352 = vmatpush1.msra.mxu0 0.0
    %1353 = vmatprep.subr.mxu0 0.0
    %1354 = vmatpush1.msra.mxu0 0.0
    %1355 = vmatprep.subr.mxu0 0.0
    %1356 = vmatpush1.msra.mxu0 0.0
    %1357 = vmatprep.subr.mxu0 0.0
    %1358 = vmatpush1.msra.mxu0 0.0
    %1359 = vmatprep.mubr.f32.mxu0 0.0
    %1360 = vmatmul.mubr.f32.gmra.mrb[0].mxu0 %v1293
    %v1361 = vpop.f32.mrb[0].mxu0
    %v1362 = vadd.f32 0.0, %v1361
    %v1363 = vpop.f32.mrb[0].mxu0
    %1364 = vdwg.mxu0
    %v1366 = vsel %vm345, %v1290, 0
    %v1369 = vsel %vm31, %v1289, 0
    %1371 = vmatprep.subr.mxu0 0.0
    %1372 = vmatpush1.msra.mxu0 %v1287
    %1373 = vmatprep.subr.mxu0 0.0
    %1374 = vmatpush1.msra.mxu0 %v1288
    %1375 = vmatprep.subr.mxu0 0.0
    %1376 = vmatpush1.msra.mxu0 %v1369
    %1377 = vmatprep.subr.mxu0 0.0
    %1378 = vmatpush1.msra.mxu0 0.0
    %1379 = vmatprep.subr.mxu0 0.0
    %1380 = vmatpush1.msra.mxu0 0.0
    %1381 = vmatprep.subr.mxu0 0.0
    %1382 = vmatpush1.msra.mxu0 0.0
    %1383 = vmatprep.subr.mxu0 0.0
    %1384 = vmatpush1.msra.mxu0 0.0
    %1385 = vmatprep.subr.mxu0 0.0
    %1386 = vmatpush1.msra.mxu0 0.0
    %1387 = vmatprep.subr.mxu0 0.0
    %1388 = vmatpush1.msra.mxu0 0.0
    %1389 = vmatprep.subr.mxu0 0.0
    %1390 = vmatpush1.msra.mxu0 0.0
    %1391 = vmatprep.subr.mxu0 0.0
    %1392 = vmatpush1.msra.mxu0 0.0
    %1393 = vmatprep.subr.mxu0 0.0
    %1394 = vmatpush1.msra.mxu0 0.0
    %1395 = vmatprep.subr.mxu0 0.0
    %1396 = vmatpush1.msra.mxu0 0.0
    %1397 = vmatprep.subr.mxu0 0.0
    %1398 = vmatpush1.msra.mxu0 0.0
    %1399 = vmatprep.subr.mxu0 0.0
    %1400 = vmatpush1.msra.mxu0 0.0
    %1401 = vmatprep.subr.mxu0 0.0
    %1402 = vmatpush1.msra.mxu0 0.0
    %1403 = vmatprep.subr.mxu0 0.0
    %1404 = vmatpush1.msra.mxu0 0.0
    %1405 = vmatprep.subr.mxu0 0.0
    %1406 = vmatpush1.msra.mxu0 0.0
    %1407 = vmatprep.subr.mxu0 0.0
    %1408 = vmatpush1.msra.mxu0 0.0
    %1409 = vmatprep.subr.mxu0 0.0
    %1410 = vmatpush1.msra.mxu0 0.0
    %1411 = vmatprep.subr.mxu0 0.0
    %1412 = vmatpush1.msra.mxu0 0.0
    %1413 = vmatprep.subr.mxu0 0.0
    %1414 = vmatpush1.msra.mxu0 0.0
    %1415 = vmatprep.subr.mxu0 0.0
    %1416 = vmatpush1.msra.mxu0 0.0
    %1417 = vmatprep.subr.mxu0 0.0
    %1418 = vmatpush1.msra.mxu0 0.0
    %1419 = vmatprep.subr.mxu0 0.0
    %1420 = vmatpush1.msra.mxu0 0.0
    %1421 = vmatprep.subr.mxu0 0.0
    %1422 = vmatpush1.msra.mxu0 0.0
    %1423 = vmatprep.subr.mxu0 0.0
    %1424 = vmatpush1.msra.mxu0 0.0
    %1425 = vmatprep.subr.mxu0 0.0
    %1426 = vmatpush1.msra.mxu0 0.0
    %1427 = vmatprep.subr.mxu0 0.0
    %1428 = vmatpush1.msra.mxu0 0.0
    %1429 = vmatprep.subr.mxu0 0.0
    %1430 = vmatpush1.msra.mxu0 0.0
    %1431 = vmatprep.subr.mxu0 0.0
    %1432 = vmatpush1.msra.mxu0 0.0
    %1433 = vmatprep.subr.mxu0 0.0
    %1434 = vmatpush1.msra.mxu0 0.0
    %1435 = vmatprep.mubr.f32.mxu0 0.0
    %1436 = vmatmul.mubr.f32.gmra.mrb[0].mxu0 %v1366
    %v1437 = vpop.f32.mrb[0].mxu0
    %v1438 = vadd.f32 %v1362, %v1437
    %v1439 = vpop.f32.mrb[0].mxu0
    %1440 = vdwg.mxu0
    %v1441 = vld [vmem:[#allocation2 + $0x250] sm:$0x1f]
    %1443 = vset.pattern.permute.xlu0 0
    %1444 = vperm.xlu0 %1443, %v1441
    %v1445 = vpop.permute.xlu0 %1444
    %v1447 = vadd.f32 %v1438, %v1445
    %v1448 = vxor.u32 %v1447, 2147483648
    %v1449 = vmul.f32 %v1448, 1.442695
    %v1450 = vpow.pop %v1449
    %v1451 = vadd.f32 %v1450, 1.0
    %v1452 = vrcp.pop %v1451
    %v1453 = vmul.f32 1.0, %v1452
    %v1454 = vsub.f32 1.0, %v1453
    %v1455 = vadd.f32 %v1454, 1e-08
    %v1456 = vlog2.pop %v1455
    %v1457 = vmul.f32 %v1456, 0.6931472
    %v1458 = vld [vmem:[#allocation2 + $0x258] sm:$0x1f]
    %vm1459 = vcmask 39936
    %v1461 = vsel %vm1459, %v1458, 0
    %v1464 = vsel %vm180, %v1457, 0
    %1466 = vmatprep.subr.mxu0 0.0
    %1467 = vmatpush1.msra.mxu0 %v1464
    %1468 = vmatprep.subr.mxu0 0.0
    %1469 = vmatpush1.msra.mxu0 0.0
    %1470 = vmatprep.subr.mxu0 0.0
    %1471 = vmatpush1.msra.mxu0 0.0
    %1472 = vmatprep.subr.mxu0 0.0
    %1473 = vmatpush1.msra.mxu0 0.0
    %1474 = vmatprep.subr.mxu0 0.0
    %1475 = vmatpush1.msra.mxu0 0.0
    %1476 = vmatprep.subr.mxu0 0.0
    %1477 = vmatpush1.msra.mxu0 0.0
    %1478 = vmatprep.subr.mxu0 0.0
    %1479 = vmatpush1.msra.mxu0 0.0
    %1480 = vmatprep.subr.mxu0 0.0
    %1481 = vmatpush1.msra.mxu0 0.0
    %1482 = vmatprep.subr.mxu0 0.0
    %1483 = vmatpush1.msra.mxu0 0.0
    %1484 = vmatprep.subr.mxu0 0.0
    %1485 = vmatpush1.msra.mxu0 0.0
    %1486 = vmatprep.subr.mxu0 0.0
    %1487 = vmatpush1.msra.mxu0 0.0
    %1488 = vmatprep.subr.mxu0 0.0
    %1489 = vmatpush1.msra.mxu0 0.0
    %1490 = vmatprep.subr.mxu0 0.0
    %1491 = vmatpush1.msra.mxu0 0.0
    %1492 = vmatprep.subr.mxu0 0.0
    %1493 = vmatpush1.msra.mxu0 0.0
    %1494 = vmatprep.subr.mxu0 0.0
    %1495 = vmatpush1.msra.mxu0 0.0
    %1496 = vmatprep.subr.mxu0 0.0
    %1497 = vmatpush1.msra.mxu0 0.0
    %1498 = vmatprep.subr.mxu0 0.0
    %1499 = vmatpush1.msra.mxu0 0.0
    %1500 = vmatprep.subr.mxu0 0.0
    %1501 = vmatpush1.msra.mxu0 0.0
    %1502 = vmatprep.subr.mxu0 0.0
    %1503 = vmatpush1.msra.mxu0 0.0
    %1504 = vmatprep.subr.mxu0 0.0
    %1505 = vmatpush1.msra.mxu0 0.0
    %1506 = vmatprep.subr.mxu0 0.0
    %1507 = vmatpush1.msra.mxu0 0.0
    %1508 = vmatprep.subr.mxu0 0.0
    %1509 = vmatpush1.msra.mxu0 0.0
    %1510 = vmatprep.subr.mxu0 0.0
    %1511 = vmatpush1.msra.mxu0 0.0
    %1512 = vmatprep.subr.mxu0 0.0
    %1513 = vmatpush1.msra.mxu0 0.0
    %1514 = vmatprep.subr.mxu0 0.0
    %1515 = vmatpush1.msra.mxu0 0.0
    %1516 = vmatprep.subr.mxu0 0.0
    %1517 = vmatpush1.msra.mxu0 0.0
    %1518 = vmatprep.subr.mxu0 0.0
    %1519 = vmatpush1.msra.mxu0 0.0
    %1520 = vmatprep.subr.mxu0 0.0
    %1521 = vmatpush1.msra.mxu0 0.0
    %1522 = vmatprep.subr.mxu0 0.0
    %1523 = vmatpush1.msra.mxu0 0.0
    %1524 = vmatprep.subr.mxu0 0.0
    %1525 = vmatpush1.msra.mxu0 0.0
    %1526 = vmatprep.subr.mxu0 0.0
    %1527 = vmatpush1.msra.mxu0 0.0
    %1528 = vmatprep.subr.mxu0 0.0
    %1529 = vmatpush1.msra.mxu0 0.0
    %1530 = vmatprep.mubr.f32.mxu0 0.0
    %1531 = vmatmul.mubr.f32.gmra.mrb[0].mxu0 %v1461
    %v1532 = vpop.f32.mrb[0].mxu0
    %v1533 = vadd.f32 0.0, %v1532
    %v1534 = vpop.f32.mrb[0].mxu0
    %1535 = vdwg.mxu0
    %v1536 = vmul.f32 %v1533, 1.442695
    %v1537 = vpow.pop %v1536
    %1538 = vst [vmem:[%s2] sm:$0x1f] %v1537
    // Predicated region
    $region14: #{fwd.1} parent=1 // pred_check
      _
    $region15: #{fwd.1} parent=1 // pred_check_branch
      %1540 = sbr.rel (0) target = $region17
    $region16: #{fwd.1} parent=1 // pred_region
      _
    $region17: #{fwd.1} parent=1 // pred_fallthru
      _
    // Predicated region
    $region18: #{fwd.1} parent=1 // pred_check
      _
    $region19: #{fwd.1} parent=1 // pred_check_branch
      %1542 = sbr.rel (0) target = $region21
    $region20: #{fwd.1} parent=1 // pred_region
      _
    $region21: #{fwd.1} parent=1 // pred_fallthru
      _
    %1543 = vsyncpa [#allocation3], 1

</llo_original>
